<compile_context>
chip_gen: v7x
topology: tpu7x:2x2x1
jax: 0.10.0
libtpu: 0.0.40
codegen_flags: <defaults>
</compile_context>

<pallas_src>
import jax
import jax.numpy as jnp
from jax.experimental import pallas as pl
from jax.experimental.pallas import tpu as pltpu

# ----------------------------- configuration --------------------------------

OBS_SIZES = {
    "base": 12,
    "obj_positions": 14,      # 7 objects x 2 -> synthetic_obs_ingredients
    "target_position": 2,
    "synthetic_obs": 2,       # appended by the network (last segment)
}
NUM_ACTIONS = 8
NUM_SKILLS = 2                # len(SKILL_COMPOSITIONS) (meta backbone output)

ACTOR_OBS = {
    "walk":       ["base", "synthetic_obs"],
    "turn":       ["base", "target_position"],
    "residual":   ["base", "obj_positions", "target_position", "synthetic_obs"],
    "locomotion": ["base", "synthetic_obs"],
}
ACTOR_HIDDEN_DIMS = {"walk": [32, 32], "turn": [32, 32], "residual": [32, 32]}
WEIGHT_HIDDEN_DIMS = {"locomotion": [32, 2]}
META_BACKBONE_DIMS = [32, 32]
SKILL_COMPOSITIONS = {"locomotion": ["walk", "turn"], "residual": ["residual"]}
EMBED_DIM = 9                                           # nn.MultiheadAttention(9, 1)
NUM_OBJECTS = OBS_SIZES["obj_positions"] // 2           # 7
META_IN = sum(OBS_SIZES.values()) - OBS_SIZES["synthetic_obs"]   # 28 (raw obs dim)

_seg, _off = {}, 0
for _k, _v in OBS_SIZES.items():
    _seg[_k] = (_off, _off + _v)
    _off += _v
BASE0, BASE1 = _seg["base"]
OBJ0, OBJ1 = _seg["obj_positions"]
TGT0, TGT1 = _seg["target_position"]

ACTOR_OBS_SIZE = {k: sum(OBS_SIZES[s] for s in v) for k, v in ACTOR_OBS.items()}

ACTOR_ORDER = ("walk", "turn", "residual")
H_ACT = ACTOR_HIDDEN_DIMS["walk"][0]          # 32
H_W = WEIGHT_HIDDEN_DIMS["locomotion"][0]     # 32
N_W = WEIGHT_HIDDEN_DIMS["locomotion"][-1]    # 2
PACK_IN = sum(ACTOR_OBS_SIZE[n] for n in ACTOR_ORDER)   # 58  (walk|turn|residual inputs)
PACK_H1 = 3 * H_ACT + H_W                               # 128 (actor hidden + weight hidden)
PACK_H2 = 3 * H_ACT                                     # 96
PACK_HEAD = 3 * 2 * NUM_ACTIONS + N_W                   # 50  (mean|std per branch + weight logits)

# ------------------------------ fused kernel ---------------------------------


def _fused_act_inference_kernel(
        obs_ref, val_ref,
        mw1, mb1, mw2, mb2, mw3, mb3,                   # meta backbone
        wq_t, bq, wk_id, wk_v, bk, wv_id, wv_v, bv, wo, bo,   # MHA(9, 1)
        aw1, ab1, aw2, ab2, awh, abh,                   # packed branches
        out_ref):
    f32 = jnp.float32

    def dot(x, wref):
        return jnp.dot(x, wref[...], preferred_element_type=f32)

    def elu(y):
        return jnp.where(y > 0.0, y, jnp.exp(jnp.minimum(y, 0.0)) - 1.0)

    def softmax_last(x):
        m = jnp.max(x, axis=-1, keepdims=True)
        e = jnp.exp(x - m)
        return e * pl.reciprocal(jnp.sum(e, axis=-1, keepdims=True), approx=True)

    obs = obs_ref[...]                       # (BT, 28)
    base = obs[:, BASE0:BASE1]               # (BT, 12)
    objp = obs[:, OBJ0:OBJ1]                 # (BT, 14)
    targ = obs[:, TGT0:TGT1]                 # (BT, 2)

    # ---------------- meta backbone -> instance weights -----------------
    h = elu(dot(obs, mw1) + mb1[...])
    h = elu(dot(h, mw2) + mb2[...])
    inst_w = softmax_last(dot(h, mw3) + mb3[...])        # (BT, NUM_SKILLS)

    # ------------- synthetic obs: single-head attention ------------------
    # query = [0,...,0, target] -> only the last 2 rows of Wq contribute.
    q = dot(targ, wq_t) + bq[...]                        # (BT, 9)
    val2 = val_ref[...]                                  # (BT, 14): col 2s+j = value of key s
    wkid, wkv, bkm = wk_id[...], wk_v[...], bk[...]
    wvid, wvv, bvm = wv_id[...], wv_v[...], bv[...]
    scale = EMBED_DIM ** -0.5

    score_cols, v_list = [], []
    for s in range(NUM_OBJECTS):
        v0 = val2[:, 2 * s:2 * s + 1]                    # (BT, 1)
        v1 = val2[:, 2 * s + 1:2 * s + 2]
        # key_s = one_hot(s) -> row s of Wk (first 7 rows) + value part + bias
        k_s = wkid[s:s + 1, :] + bkm + v0 * wkv[0:1, :] + v1 * wkv[1:2, :]   # (BT, 9)
        v_s = wvid[s:s + 1, :] + bvm + v0 * wvv[0:1, :] + v1 * wvv[1:2, :]   # (BT, 9)
        score_cols.append(jnp.sum(q * k_s, axis=-1, keepdims=True) * scale)  # (BT, 1)
        v_list.append(v_s)
    scores = jnp.concatenate(score_cols, axis=-1)        # (BT, 7)
    m = jnp.max(scores, axis=-1, keepdims=True)
    p = jnp.exp(scores - m)
    p = p * pl.reciprocal(jnp.sum(p, axis=-1, keepdims=True), approx=True)
    attn = p[:, 0:1] * v_list[0]
    for s in range(1, NUM_OBJECTS):
        attn = attn + p[:, s:s + 1] * v_list[s]          # (BT, 9)
    attn = dot(attn, wo) + bo[...]                       # out-proj
    synth = attn[:, 0:2]
    nrm = jnp.sqrt(jnp.sum(synth * synth, axis=-1, keepdims=True))
    synth3 = (synth / jnp.maximum(nrm, 1e-12)) * 3.0     # F.normalize(.) * 3

    # ------------- packed actor + weight branches ------------------------
    x_walk = jnp.concatenate([base, synth3], axis=-1)                  # (BT, 14)
    x_turn = jnp.concatenate([base, targ], axis=-1)                    # (BT, 14)
    x_res = jnp.concatenate([base, objp, targ, synth3], axis=-1)       # (BT, 30)
    x_pack = jnp.concatenate([x_walk, x_turn, x_res], axis=-1)         # (BT, 58)

    h1 = elu(dot(x_pack, aw1) + ab1[...])                              # (BT, 128)
    h2 = elu(dot(h1[:, :], aw2) + ab2[...])                            # (BT, 96)
    hcat = jnp.concatenate([h2, h1[:, PACK_H2:PACK_H1]], axis=-1)      # (BT, 128)
    heads = dot(hcat, awh) + abh[...]                                  # (BT, 50)

    walk_mean = heads[:, 0:8]
    walk_std = jnp.abs(heads[:, 8:16])
    turn_mean = heads[:, 16:24]
    turn_std = jnp.abs(heads[:, 24:32])
    res_mean = heads[:, 32:40]
    res_std = jnp.abs(heads[:, 40:48])
    loc_w = softmax_last(heads[:, 48:50])                              # (BT, 2)

    # ------------- combine walk + turn -> locomotion ----------------------
    sw_walk = loc_w[:, 0:1] / (walk_std + 0.01)
    sw_turn = loc_w[:, 1:2] / (turn_std + 0.01)
    loc_std = pl.reciprocal(sw_walk + sw_turn, approx=True)
    loc_mean = loc_std * (walk_mean * sw_walk + turn_mean * sw_turn)

    # ------------- combine locomotion + residual with instance weights ----
    sw_loc = inst_w[:, 0:1] / (loc_std + 0.01)
    sw_res = inst_w[:, 1:2] / (res_std + 0.01)
    comb_std = pl.reciprocal(sw_loc + sw_res, approx=True)
    out_ref[...] = comb_std * (loc_mean * sw_loc + res_mean * sw_res)


# ------------------------------ parameter setup ------------------------------


def _init_linear(key, din, dout):
    k1, k2 = jax.random.split(key)
    return {"w": jax.random.normal(k1, (din, dout), jnp.float32) * 0.1,
            "b": jax.random.normal(k2, (1, dout), jnp.float32) * 0.1}


def init_params(key):
    keys = iter(jax.random.split(key, 128))
    lin = lambda din, dout: _init_linear(next(keys), din, dout)
    params = {}

    # MetaBackbone: Linear(28,32) ELU Linear(32,32) ELU Linear(32,NUM_SKILLS)
    dims = [META_IN] + META_BACKBONE_DIMS + [NUM_SKILLS]
    params["meta"] = [lin(dims[i], dims[i + 1]) for i in range(len(dims) - 1)]

    # SynthObsNet: nn.MultiheadAttention(9, 1) (q/k/v in-proj + out-proj, all biased)
    params["mha"] = {n: lin(EMBED_DIM, EMBED_DIM) for n in ("wq", "wk", "wv", "wo")}

    # Policy branches
    params["actors"] = {}
    for name, hdims in ACTOR_HIDDEN_DIMS.items():
        din = ACTOR_OBS_SIZE[name]
        bdims = [din] + hdims
        base = [lin(bdims[i], bdims[i + 1]) for i in range(len(bdims) - 1)]
        std_head = lin(hdims[-1], NUM_ACTIONS)
        std_head["b"] = jnp.ones_like(std_head["b"])   # action_stds.bias.data.fill_(1.0)
        params["actors"][name] = {"base": base,
                                  "mean": lin(hdims[-1], NUM_ACTIONS),
                                  "std": std_head}

    # Weight branches
    params["weights"] = {}
    for name, wdims in WEIGHT_HIDDEN_DIMS.items():
        din = ACTOR_OBS_SIZE[name]
        dims = [din] + wdims[:-1] + [wdims[-1]]
        params["weights"][name] = [lin(dims[i], dims[i + 1]) for i in range(len(dims) - 1)]
    return params


def _pack_params(params):
    """Build the flat, lane-dense parameter tuple consumed by the fused kernel."""
    meta = params["meta"]
    mha = params["mha"]
    act = params["actors"]
    locw = params["weights"]["locomotion"]

    # --- packed actor/weight branches: block-diagonal matrices -----------
    din = [ACTOR_OBS_SIZE[n] for n in ACTOR_ORDER]                     # 14, 14, 30
    aw1 = jnp.zeros((PACK_IN, PACK_H1), jnp.float32)
    ab1_parts, r = [], 0
    for j, n in enumerate(ACTOR_ORDER):
        aw1 = aw1.at[r:r + din[j], j * H_ACT:(j + 1) * H_ACT].set(act[n]["base"][0]["w"])
        ab1_parts.append(act[n]["base"][0]["b"])
        r += din[j]
    # locomotion weight-branch layer 0 reads the same input block as "walk"
    aw1 = aw1.at[0:ACTOR_OBS_SIZE["locomotion"], 3 * H_ACT:3 * H_ACT + H_W].set(locw[0]["w"])
    ab1_parts.append(locw[0]["b"])
    ab1 = jnp.concatenate(ab1_parts, axis=-1)                          # (1, 128)

    aw2 = jnp.zeros((PACK_H1, PACK_H2), jnp.float32)
    ab2_parts = []
    for j, n in enumerate(ACTOR_ORDER):
        aw2 = aw2.at[j * H_ACT:(j + 1) * H_ACT, j * H_ACT:(j + 1) * H_ACT].set(
            act[n]["base"][1]["w"])
        ab2_parts.append(act[n]["base"][1]["b"])
    ab2 = jnp.concatenate(ab2_parts, axis=-1)                          # (1, 96)

    awh = jnp.zeros((PACK_H1, PACK_HEAD), jnp.float32)
    abh_parts = []
    for j, n in enumerate(ACTOR_ORDER):
        hw = jnp.concatenate([act[n]["mean"]["w"], act[n]["std"]["w"]], axis=-1)   # (32,16)
        awh = awh.at[j * H_ACT:(j + 1) * H_ACT,
                     j * 2 * NUM_ACTIONS:(j + 1) * 2 * NUM_ACTIONS].set(hw)
        abh_parts.append(jnp.concatenate([act[n]["mean"]["b"], act[n]["std"]["b"]], axis=-1))
    awh = awh.at[PACK_H2:PACK_H2 + H_W, 3 * 2 * NUM_ACTIONS:].set(locw[1]["w"])
    abh_parts.append(locw[1]["b"])
    abh = jnp.concatenate(abh_parts, axis=-1)                          # (1, 50)

    # --- MHA: pre-slice in-proj weights (one-hot rows vs value rows) -----
    K7 = NUM_OBJECTS
    flat = (
        meta[0]["w"], meta[0]["b"], meta[1]["w"], meta[1]["b"], meta[2]["w"], meta[2]["b"],
        mha["wq"]["w"][K7:, :], mha["wq"]["b"],
        mha["wk"]["w"][:K7, :], mha["wk"]["w"][K7:, :], mha["wk"]["b"],
        mha["wv"]["w"][:K7, :], mha["wv"]["w"][K7:, :], mha["wv"]["b"],
        mha["wo"]["w"], mha["wo"]["b"],
        aw1, ab1, aw2, ab2, awh, abh,
    )
    return flat


# ------------------------------ forward (act_inference) ----------------------


def act_inference(params, obs):
    B = obs.shape[0]

    # Bug-compatible with torch: value = obj_positions.view(-1, B, 2)
    # (mixes batch/object ordering for B > 1 exactly like the PyTorch module),
    # then laid out batch-major as (B, 7*2) for per-sample use in the kernel.
    ing = obs[:, OBJ0:OBJ1]                                            # (B, 14)
    val2 = ing.reshape(-1, B, 2).transpose(1, 0, 2).reshape(B, NUM_OBJECTS * 2)

    # Pad batch to a sublane-aligned tile; tile over a parallel grid axis.
    BT = 128 if B >= 128 else ((B + 7) // 8) * 8
    Bp = ((B + BT - 1) // BT) * BT
    pad = Bp - B
    obs_p = jnp.pad(obs, ((0, pad), (0, 0))) if pad else obs
    val_p = jnp.pad(val2, ((0, pad), (0, 0))) if pad else val2

    flat = _pack_params(params)

    batch_specs = [
        pl.BlockSpec((BT, META_IN), lambda i: (i, 0)),
        pl.BlockSpec((BT, NUM_OBJECTS * 2), lambda i: (i, 0)),
    ]
    param_specs = [pl.BlockSpec(p.shape, lambda i, nd=p.ndim: (0,) * nd) for p in flat]

    out = pl.pallas_call(
        _fused_act_inference_kernel,
        out_shape=jax.ShapeDtypeStruct((Bp, NUM_ACTIONS), jnp.float32),
        grid=(Bp // BT,),
        in_specs=batch_specs + param_specs,
        out_specs=pl.BlockSpec((BT, NUM_ACTIONS), lambda i: (i, 0)),
        compiler_params=pltpu.CompilerParams(dimension_semantics=("parallel",)),
    )(obs_p, val_p, *flat)
    return out[:B]


# ----------------------------------- main ------------------------------------

if __name__ == "__main__":
    key = jax.random.PRNGKey(0)
    pkey, okey = jax.random.split(key)
    params = init_params(pkey)

    B = 4
    obs = jax.random.normal(okey, (B, META_IN), jnp.float32)           # (4, 28)

    out = jax.jit(act_inference)(params, obs)
    out = jax.block_until_ready(out)

    assert out.shape == (B, NUM_ACTIONS), out.shape
    assert bool(jnp.all(jnp.isfinite(out)))
    print("KERNEL_OK")
</pallas_src>

<mosaic_0001>
module attributes {stable_mosaic.version = 11 : i64} {
  func.func @_fused_act_inference_kernel(%arg0: i32, %arg1: memref<8x28xf32, #tpu.memory_space<vmem>>, %arg2: memref<8x14xf32, #tpu.memory_space<vmem>>, %arg3: memref<28x32xf32, #tpu.memory_space<vmem>>, %arg4: memref<1x32xf32, #tpu.memory_space<vmem>>, %arg5: memref<32x32xf32, #tpu.memory_space<vmem>>, %arg6: memref<1x32xf32, #tpu.memory_space<vmem>>, %arg7: memref<32x2xf32, #tpu.memory_space<vmem>>, %arg8: memref<1x2xf32, #tpu.memory_space<vmem>>, %arg9: memref<2x9xf32, #tpu.memory_space<vmem>>, %arg10: memref<1x9xf32, #tpu.memory_space<vmem>>, %arg11: memref<7x9xf32, #tpu.memory_space<vmem>>, %arg12: memref<2x9xf32, #tpu.memory_space<vmem>>, %arg13: memref<1x9xf32, #tpu.memory_space<vmem>>, %arg14: memref<7x9xf32, #tpu.memory_space<vmem>>, %arg15: memref<2x9xf32, #tpu.memory_space<vmem>>, %arg16: memref<1x9xf32, #tpu.memory_space<vmem>>, %arg17: memref<9x9xf32, #tpu.memory_space<vmem>>, %arg18: memref<1x9xf32, #tpu.memory_space<vmem>>, %arg19: memref<58x128xf32, #tpu.memory_space<vmem>>, %arg20: memref<1x128xf32, #tpu.memory_space<vmem>>, %arg21: memref<128x96xf32, #tpu.memory_space<vmem>>, %arg22: memref<1x96xf32, #tpu.memory_space<vmem>>, %arg23: memref<128x50xf32, #tpu.memory_space<vmem>>, %arg24: memref<1x50xf32, #tpu.memory_space<vmem>>, %arg25: memref<8x8xf32, #tpu.memory_space<vmem>>) attributes {dimension_semantics = [#tpu.dimension_semantics<parallel>], iteration_bounds = array<i64: 1>, scalar_prefetch = 0 : i64, scratch_operands = 0 : i64, tpu.core_type = #tpu.core_type<tc>, window_params = [{transform_indices = @transform_0, window_bounds = array<i64: 8, 28>}, {transform_indices = @transform_1, window_bounds = array<i64: 8, 14>}, {pipeline_mode = #tpu.pipeline_mode<synchronous>, transform_indices = @transform_2, window_bounds = array<i64: 28, 32>}, {pipeline_mode = #tpu.pipeline_mode<synchronous>, transform_indices = @transform_3, window_bounds = array<i64: 1, 32>}, {pipeline_mode = #tpu.pipeline_mode<synchronous>, transform_indices = @transform_4, window_bounds = array<i64: 32, 32>}, {pipeline_mode = #tpu.pipeline_mode<synchronous>, transform_indices = @transform_5, window_bounds = array<i64: 1, 32>}, {pipeline_mode = #tpu.pipeline_mode<synchronous>, transform_indices = @transform_6, window_bounds = array<i64: 32, 2>}, {pipeline_mode = #tpu.pipeline_mode<synchronous>, transform_indices = @transform_7, window_bounds = array<i64: 1, 2>}, {pipeline_mode = #tpu.pipeline_mode<synchronous>, transform_indices = @transform_8, window_bounds = array<i64: 2, 9>}, {pipeline_mode = #tpu.pipeline_mode<synchronous>, transform_indices = @transform_9, window_bounds = array<i64: 1, 9>}, {pipeline_mode = #tpu.pipeline_mode<synchronous>, transform_indices = @transform_10, window_bounds = array<i64: 7, 9>}, {pipeline_mode = #tpu.pipeline_mode<synchronous>, transform_indices = @transform_11, window_bounds = array<i64: 2, 9>}, {pipeline_mode = #tpu.pipeline_mode<synchronous>, transform_indices = @transform_12, window_bounds = array<i64: 1, 9>}, {pipeline_mode = #tpu.pipeline_mode<synchronous>, transform_indices = @transform_13, window_bounds = array<i64: 7, 9>}, {pipeline_mode = #tpu.pipeline_mode<synchronous>, transform_indices = @transform_14, window_bounds = array<i64: 2, 9>}, {pipeline_mode = #tpu.pipeline_mode<synchronous>, transform_indices = @transform_15, window_bounds = array<i64: 1, 9>}, {pipeline_mode = #tpu.pipeline_mode<synchronous>, transform_indices = @transform_16, window_bounds = array<i64: 9, 9>}, {pipeline_mode = #tpu.pipeline_mode<synchronous>, transform_indices = @transform_17, window_bounds = array<i64: 1, 9>}, {pipeline_mode = #tpu.pipeline_mode<synchronous>, transform_indices = @transform_18, window_bounds = array<i64: 58, 128>}, {pipeline_mode = #tpu.pipeline_mode<synchronous>, transform_indices = @transform_19, window_bounds = array<i64: 1, 128>}, {pipeline_mode = #tpu.pipeline_mode<synchronous>, transform_indices = @transform_20, window_bounds = array<i64: 128, 96>}, {pipeline_mode = #tpu.pipeline_mode<synchronous>, transform_indices = @transform_21, window_bounds = array<i64: 1, 96>}, {pipeline_mode = #tpu.pipeline_mode<synchronous>, transform_indices = @transform_22, window_bounds = array<i64: 128, 50>}, {pipeline_mode = #tpu.pipeline_mode<synchronous>, transform_indices = @transform_23, window_bounds = array<i64: 1, 50>}, {transform_indices = @transform_24, window_bounds = array<i64: 8, 8>}]} {
    %c0 = arith.constant 0 : index
    %c0_0 = arith.constant 0 : index
    %0 = vector.load %arg1[%c0, %c0_0] : memref<8x28xf32, #tpu.memory_space<vmem>>, vector<8x28xf32>
    %1 = vector.extract_strided_slice %0 {offsets = [0, 0], sizes = [8, 12], strides = [1, 1]} : vector<8x28xf32> to vector<8x12xf32>
    %2 = vector.extract_strided_slice %0 {offsets = [0, 12], sizes = [8, 14], strides = [1, 1]} : vector<8x28xf32> to vector<8x14xf32>
    %3 = vector.extract_strided_slice %0 {offsets = [0, 26], sizes = [8, 2], strides = [1, 1]} : vector<8x28xf32> to vector<8x2xf32>
    %c0_1 = arith.constant 0 : index
    %c0_2 = arith.constant 0 : index
    %4 = vector.load %arg3[%c0_1, %c0_2] : memref<28x32xf32, #tpu.memory_space<vmem>>, vector<28x32xf32>
    %cst = arith.constant dense<0.000000e+00> : vector<8x32xf32>
    %5 = tpu.matmul %0, %4, %cst {dimension_numbers = #tpu.dot_dimension_numbers<[1], [0], [0], [1], [0, 0, 1, 1], [], []>} : vector<8x28xf32>, vector<28x32xf32>, vector<8x32xf32> -> vector<8x32xf32>
    %c0_3 = arith.constant 0 : index
    %c0_4 = arith.constant 0 : index
    %6 = vector.load %arg4[%c0_3, %c0_4] : memref<1x32xf32, #tpu.memory_space<vmem>>, vector<1x32xf32>
    %7 = vector.broadcast %6 : vector<1x32xf32> to vector<8x32xf32>
    %8 = arith.addf %5, %7 : vector<8x32xf32>
    %cst_5 = arith.constant 0.000000e+00 : f32
    %9 = vector.broadcast %cst_5 : f32 to vector<8x32xf32>
    %10 = arith.cmpf ogt, %8, %9 : vector<8x32xf32>
    %cst_6 = arith.constant 0.000000e+00 : f32
    %11 = vector.broadcast %cst_6 : f32 to vector<8x32xf32>
    %12 = arith.minimumf %8, %11 : vector<8x32xf32>
    %13 = math.exp %12 : vector<8x32xf32>
    %cst_7 = arith.constant 1.000000e+00 : f32
    %14 = vector.broadcast %cst_7 : f32 to vector<8x32xf32>
    %15 = arith.subf %13, %14 : vector<8x32xf32>
    %16 = arith.select %10, %8, %15 : vector<8x32xi1>, vector<8x32xf32>
    %c0_8 = arith.constant 0 : index
    %c0_9 = arith.constant 0 : index
    %17 = vector.load %arg5[%c0_8, %c0_9] : memref<32x32xf32, #tpu.memory_space<vmem>>, vector<32x32xf32>
    %cst_10 = arith.constant dense<0.000000e+00> : vector<8x32xf32>
    %18 = tpu.matmul %16, %17, %cst_10 {dimension_numbers = #tpu.dot_dimension_numbers<[1], [0], [0], [1], [0, 0, 1, 1], [], []>} : vector<8x32xf32>, vector<32x32xf32>, vector<8x32xf32> -> vector<8x32xf32>
    %c0_11 = arith.constant 0 : index
    %c0_12 = arith.constant 0 : index
    %19 = vector.load %arg6[%c0_11, %c0_12] : memref<1x32xf32, #tpu.memory_space<vmem>>, vector<1x32xf32>
    %20 = vector.broadcast %19 : vector<1x32xf32> to vector<8x32xf32>
    %21 = arith.addf %18, %20 : vector<8x32xf32>
    %cst_13 = arith.constant 0.000000e+00 : f32
    %22 = vector.broadcast %cst_13 : f32 to vector<8x32xf32>
    %23 = arith.cmpf ogt, %21, %22 : vector<8x32xf32>
    %cst_14 = arith.constant 0.000000e+00 : f32
    %24 = vector.broadcast %cst_14 : f32 to vector<8x32xf32>
    %25 = arith.minimumf %21, %24 : vector<8x32xf32>
    %26 = math.exp %25 : vector<8x32xf32>
    %cst_15 = arith.constant 1.000000e+00 : f32
    %27 = vector.broadcast %cst_15 : f32 to vector<8x32xf32>
    %28 = arith.subf %26, %27 : vector<8x32xf32>
    %29 = arith.select %23, %21, %28 : vector<8x32xi1>, vector<8x32xf32>
    %c0_16 = arith.constant 0 : index
    %c0_17 = arith.constant 0 : index
    %30 = vector.load %arg7[%c0_16, %c0_17] : memref<32x2xf32, #tpu.memory_space<vmem>>, vector<32x2xf32>
    %cst_18 = arith.constant dense<0.000000e+00> : vector<8x2xf32>
    %31 = tpu.matmul %29, %30, %cst_18 {dimension_numbers = #tpu.dot_dimension_numbers<[1], [0], [0], [1], [0, 0, 1, 1], [], []>} : vector<8x32xf32>, vector<32x2xf32>, vector<8x2xf32> -> vector<8x2xf32>
    %c0_19 = arith.constant 0 : index
    %c0_20 = arith.constant 0 : index
    %32 = vector.load %arg8[%c0_19, %c0_20] : memref<1x2xf32, #tpu.memory_space<vmem>>, vector<1x2xf32>
    %33 = vector.broadcast %32 : vector<1x2xf32> to vector<8x2xf32>
    %34 = arith.addf %31, %33 : vector<8x2xf32>
    %cst_21 = arith.constant dense<0xFF800000> : vector<8xf32>
    %35 = vector.multi_reduction <maximumf>, %34, %cst_21 [1] : vector<8x2xf32> to vector<8xf32>
    %36 = vector.shape_cast %35 : vector<8xf32> to vector<8x1xf32>
    %37 = vector.broadcast %36 : vector<8x1xf32> to vector<8x2xf32>
    %38 = arith.subf %34, %37 : vector<8x2xf32>
    %39 = math.exp %38 : vector<8x2xf32>
    %cst_22 = arith.constant dense<0.000000e+00> : vector<8xf32>
    %40 = vector.multi_reduction <add>, %39, %cst_22 [1] : vector<8x2xf32> to vector<8xf32>
    %41 = vector.shape_cast %40 : vector<8xf32> to vector<8x1xf32>
    %42 = tpu.reciprocal %41 {approx = true} : vector<8x1xf32> -> vector<8x1xf32>
    %43 = vector.broadcast %42 : vector<8x1xf32> to vector<8x2xf32>
    %44 = arith.mulf %39, %43 : vector<8x2xf32>
    %c0_23 = arith.constant 0 : index
    %c0_24 = arith.constant 0 : index
    %45 = vector.load %arg9[%c0_23, %c0_24] : memref<2x9xf32, #tpu.memory_space<vmem>>, vector<2x9xf32>
    %cst_25 = arith.constant dense<0.000000e+00> : vector<8x9xf32>
    %46 = tpu.matmul %3, %45, %cst_25 {dimension_numbers = #tpu.dot_dimension_numbers<[1], [0], [0], [1], [0, 0, 1, 1], [], []>} : vector<8x2xf32>, vector<2x9xf32>, vector<8x9xf32> -> vector<8x9xf32>
    %c0_26 = arith.constant 0 : index
    %c0_27 = arith.constant 0 : index
    %47 = vector.load %arg10[%c0_26, %c0_27] : memref<1x9xf32, #tpu.memory_space<vmem>>, vector<1x9xf32>
    %48 = vector.broadcast %47 : vector<1x9xf32> to vector<8x9xf32>
    %49 = arith.addf %46, %48 : vector<8x9xf32>
    %c0_28 = arith.constant 0 : index
    %c0_29 = arith.constant 0 : index
    %50 = vector.load %arg2[%c0_28, %c0_29] : memref<8x14xf32, #tpu.memory_space<vmem>>, vector<8x14xf32>
    %c0_30 = arith.constant 0 : index
    %c0_31 = arith.constant 0 : index
    %51 = vector.load %arg11[%c0_30, %c0_31] : memref<7x9xf32, #tpu.memory_space<vmem>>, vector<7x9xf32>
    %c0_32 = arith.constant 0 : index
    %c0_33 = arith.constant 0 : index
    %52 = vector.load %arg12[%c0_32, %c0_33] : memref<2x9xf32, #tpu.memory_space<vmem>>, vector<2x9xf32>
    %c0_34 = arith.constant 0 : index
    %c0_35 = arith.constant 0 : index
    %53 = vector.load %arg13[%c0_34, %c0_35] : memref<1x9xf32, #tpu.memory_space<vmem>>, vector<1x9xf32>
    %c0_36 = arith.constant 0 : index
    %c0_37 = arith.constant 0 : index
    %54 = vector.load %arg14[%c0_36, %c0_37] : memref<7x9xf32, #tpu.memory_space<vmem>>, vector<7x9xf32>
    %c0_38 = arith.constant 0 : index
    %c0_39 = arith.constant 0 : index
    %55 = vector.load %arg15[%c0_38, %c0_39] : memref<2x9xf32, #tpu.memory_space<vmem>>, vector<2x9xf32>
    %c0_40 = arith.constant 0 : index
    %c0_41 = arith.constant 0 : index
    %56 = vector.load %arg16[%c0_40, %c0_41] : memref<1x9xf32, #tpu.memory_space<vmem>>, vector<1x9xf32>
    %57 = vector.extract_strided_slice %50 {offsets = [0, 0], sizes = [8, 1], strides = [1, 1]} : vector<8x14xf32> to vector<8x1xf32>
    %58 = vector.extract_strided_slice %50 {offsets = [0, 1], sizes = [8, 1], strides = [1, 1]} : vector<8x14xf32> to vector<8x1xf32>
    %59 = vector.extract_strided_slice %51 {offsets = [0, 0], sizes = [1, 9], strides = [1, 1]} : vector<7x9xf32> to vector<1x9xf32>
    %60 = arith.addf %59, %53 : vector<1x9xf32>
    %61 = vector.extract_strided_slice %52 {offsets = [0, 0], sizes = [1, 9], strides = [1, 1]} : vector<2x9xf32> to vector<1x9xf32>
    %62 = vector.broadcast %57 : vector<8x1xf32> to vector<8x9xf32>
    %63 = vector.broadcast %61 : vector<1x9xf32> to vector<8x9xf32>
    %64 = arith.mulf %62, %63 : vector<8x9xf32>
    %65 = vector.broadcast %60 : vector<1x9xf32> to vector<8x9xf32>
    %66 = arith.addf %65, %64 : vector<8x9xf32>
    %67 = vector.extract_strided_slice %52 {offsets = [1, 0], sizes = [1, 9], strides = [1, 1]} : vector<2x9xf32> to vector<1x9xf32>
    %68 = vector.broadcast %58 : vector<8x1xf32> to vector<8x9xf32>
    %69 = vector.broadcast %67 : vector<1x9xf32> to vector<8x9xf32>
    %70 = arith.mulf %68, %69 : vector<8x9xf32>
    %71 = arith.addf %66, %70 : vector<8x9xf32>
    %72 = vector.extract_strided_slice %54 {offsets = [0, 0], sizes = [1, 9], strides = [1, 1]} : vector<7x9xf32> to vector<1x9xf32>
    %73 = arith.addf %72, %56 : vector<1x9xf32>
    %74 = vector.extract_strided_slice %55 {offsets = [0, 0], sizes = [1, 9], strides = [1, 1]} : vector<2x9xf32> to vector<1x9xf32>
    %75 = vector.broadcast %57 : vector<8x1xf32> to vector<8x9xf32>
    %76 = vector.broadcast %74 : vector<1x9xf32> to vector<8x9xf32>
    %77 = arith.mulf %75, %76 : vector<8x9xf32>
    %78 = vector.broadcast %73 : vector<1x9xf32> to vector<8x9xf32>
    %79 = arith.addf %78, %77 : vector<8x9xf32>
    %80 = vector.extract_strided_slice %55 {offsets = [1, 0], sizes = [1, 9], strides = [1, 1]} : vector<2x9xf32> to vector<1x9xf32>
    %81 = vector.broadcast %58 : vector<8x1xf32> to vector<8x9xf32>
    %82 = vector.broadcast %80 : vector<1x9xf32> to vector<8x9xf32>
    %83 = arith.mulf %81, %82 : vector<8x9xf32>
    %84 = arith.addf %79, %83 : vector<8x9xf32>
    %85 = arith.mulf %49, %71 : vector<8x9xf32>
    %cst_42 = arith.constant dense<0.000000e+00> : vector<8xf32>
    %86 = vector.multi_reduction <add>, %85, %cst_42 [1] : vector<8x9xf32> to vector<8xf32>
    %87 = vector.shape_cast %86 : vector<8xf32> to vector<8x1xf32>
    %cst_43 = arith.constant 0.333333343 : f32
    %88 = vector.broadcast %cst_43 : f32 to vector<8x1xf32>
    %89 = arith.mulf %87, %88 : vector<8x1xf32>
    %90 = vector.extract_strided_slice %50 {offsets = [0, 2], sizes = [8, 1], strides = [1, 1]} : vector<8x14xf32> to vector<8x1xf32>
    %91 = vector.extract_strided_slice %50 {offsets = [0, 3], sizes = [8, 1], strides = [1, 1]} : vector<8x14xf32> to vector<8x1xf32>
    %92 = vector.extract_strided_slice %51 {offsets = [1, 0], sizes = [1, 9], strides = [1, 1]} : vector<7x9xf32> to vector<1x9xf32>
    %93 = arith.addf %92, %53 : vector<1x9xf32>
    %94 = vector.extract_strided_slice %52 {offsets = [0, 0], sizes = [1, 9], strides = [1, 1]} : vector<2x9xf32> to vector<1x9xf32>
    %95 = vector.broadcast %90 : vector<8x1xf32> to vector<8x9xf32>
    %96 = vector.broadcast %94 : vector<1x9xf32> to vector<8x9xf32>
    %97 = arith.mulf %95, %96 : vector<8x9xf32>
    %98 = vector.broadcast %93 : vector<1x9xf32> to vector<8x9xf32>
    %99 = arith.addf %98, %97 : vector<8x9xf32>
    %100 = vector.extract_strided_slice %52 {offsets = [1, 0], sizes = [1, 9], strides = [1, 1]} : vector<2x9xf32> to vector<1x9xf32>
    %101 = vector.broadcast %91 : vector<8x1xf32> to vector<8x9xf32>
    %102 = vector.broadcast %100 : vector<1x9xf32> to vector<8x9xf32>
    %103 = arith.mulf %101, %102 : vector<8x9xf32>
    %104 = arith.addf %99, %103 : vector<8x9xf32>
    %105 = vector.extract_strided_slice %54 {offsets = [1, 0], sizes = [1, 9], strides = [1, 1]} : vector<7x9xf32> to vector<1x9xf32>
    %106 = arith.addf %105, %56 : vector<1x9xf32>
    %107 = vector.extract_strided_slice %55 {offsets = [0, 0], sizes = [1, 9], strides = [1, 1]} : vector<2x9xf32> to vector<1x9xf32>
    %108 = vector.broadcast %90 : vector<8x1xf32> to vector<8x9xf32>
    %109 = vector.broadcast %107 : vector<1x9xf32> to vector<8x9xf32>
    %110 = arith.mulf %108, %109 : vector<8x9xf32>
    %111 = vector.broadcast %106 : vector<1x9xf32> to vector<8x9xf32>
    %112 = arith.addf %111, %110 : vector<8x9xf32>
    %113 = vector.extract_strided_slice %55 {offsets = [1, 0], sizes = [1, 9], strides = [1, 1]} : vector<2x9xf32> to vector<1x9xf32>
    %114 = vector.broadcast %91 : vector<8x1xf32> to vector<8x9xf32>
    %115 = vector.broadcast %113 : vector<1x9xf32> to vector<8x9xf32>
    %116 = arith.mulf %114, %115 : vector<8x9xf32>
    %117 = arith.addf %112, %116 : vector<8x9xf32>
    %118 = arith.mulf %49, %104 : vector<8x9xf32>
    %cst_44 = arith.constant dense<0.000000e+00> : vector<8xf32>
    %119 = vector.multi_reduction <add>, %118, %cst_44 [1] : vector<8x9xf32> to vector<8xf32>
    %120 = vector.shape_cast %119 : vector<8xf32> to vector<8x1xf32>
    %cst_45 = arith.constant 0.333333343 : f32
    %121 = vector.broadcast %cst_45 : f32 to vector<8x1xf32>
    %122 = arith.mulf %120, %121 : vector<8x1xf32>
    %123 = vector.extract_strided_slice %50 {offsets = [0, 4], sizes = [8, 1], strides = [1, 1]} : vector<8x14xf32> to vector<8x1xf32>
    %124 = vector.extract_strided_slice %50 {offsets = [0, 5], sizes = [8, 1], strides = [1, 1]} : vector<8x14xf32> to vector<8x1xf32>
    %125 = vector.extract_strided_slice %51 {offsets = [2, 0], sizes = [1, 9], strides = [1, 1]} : vector<7x9xf32> to vector<1x9xf32>
    %126 = arith.addf %125, %53 : vector<1x9xf32>
    %127 = vector.extract_strided_slice %52 {offsets = [0, 0], sizes = [1, 9], strides = [1, 1]} : vector<2x9xf32> to vector<1x9xf32>
    %128 = vector.broadcast %123 : vector<8x1xf32> to vector<8x9xf32>
    %129 = vector.broadcast %127 : vector<1x9xf32> to vector<8x9xf32>
    %130 = arith.mulf %128, %129 : vector<8x9xf32>
    %131 = vector.broadcast %126 : vector<1x9xf32> to vector<8x9xf32>
    %132 = arith.addf %131, %130 : vector<8x9xf32>
    %133 = vector.extract_strided_slice %52 {offsets = [1, 0], sizes = [1, 9], strides = [1, 1]} : vector<2x9xf32> to vector<1x9xf32>
    %134 = vector.broadcast %124 : vector<8x1xf32> to vector<8x9xf32>
    %135 = vector.broadcast %133 : vector<1x9xf32> to vector<8x9xf32>
    %136 = arith.mulf %134, %135 : vector<8x9xf32>
    %137 = arith.addf %132, %136 : vector<8x9xf32>
    %138 = vector.extract_strided_slice %54 {offsets = [2, 0], sizes = [1, 9], strides = [1, 1]} : vector<7x9xf32> to vector<1x9xf32>
    %139 = arith.addf %138, %56 : vector<1x9xf32>
    %140 = vector.extract_strided_slice %55 {offsets = [0, 0], sizes = [1, 9], strides = [1, 1]} : vector<2x9xf32> to vector<1x9xf32>
    %141 = vector.broadcast %123 : vector<8x1xf32> to vector<8x9xf32>
    %142 = vector.broadcast %140 : vector<1x9xf32> to vector<8x9xf32>
    %143 = arith.mulf %141, %142 : vector<8x9xf32>
    %144 = vector.broadcast %139 : vector<1x9xf32> to vector<8x9xf32>
    %145 = arith.addf %144, %143 : vector<8x9xf32>
    %146 = vector.extract_strided_slice %55 {offsets = [1, 0], sizes = [1, 9], strides = [1, 1]} : vector<2x9xf32> to vector<1x9xf32>
    %147 = vector.broadcast %124 : vector<8x1xf32> to vector<8x9xf32>
    %148 = vector.broadcast %146 : vector<1x9xf32> to vector<8x9xf32>
    %149 = arith.mulf %147, %148 : vector<8x9xf32>
    %150 = arith.addf %145, %149 : vector<8x9xf32>
    %151 = arith.mulf %49, %137 : vector<8x9xf32>
    %cst_46 = arith.constant dense<0.000000e+00> : vector<8xf32>
    %152 = vector.multi_reduction <add>, %151, %cst_46 [1] : vector<8x9xf32> to vector<8xf32>
    %153 = vector.shape_cast %152 : vector<8xf32> to vector<8x1xf32>
    %cst_47 = arith.constant 0.333333343 : f32
    %154 = vector.broadcast %cst_47 : f32 to vector<8x1xf32>
    %155 = arith.mulf %153, %154 : vector<8x1xf32>
    %156 = vector.extract_strided_slice %50 {offsets = [0, 6], sizes = [8, 1], strides = [1, 1]} : vector<8x14xf32> to vector<8x1xf32>
    %157 = vector.extract_strided_slice %50 {offsets = [0, 7], sizes = [8, 1], strides = [1, 1]} : vector<8x14xf32> to vector<8x1xf32>
    %158 = vector.extract_strided_slice %51 {offsets = [3, 0], sizes = [1, 9], strides = [1, 1]} : vector<7x9xf32> to vector<1x9xf32>
    %159 = arith.addf %158, %53 : vector<1x9xf32>
    %160 = vector.extract_strided_slice %52 {offsets = [0, 0], sizes = [1, 9], strides = [1, 1]} : vector<2x9xf32> to vector<1x9xf32>
    %161 = vector.broadcast %156 : vector<8x1xf32> to vector<8x9xf32>
    %162 = vector.broadcast %160 : vector<1x9xf32> to vector<8x9xf32>
    %163 = arith.mulf %161, %162 : vector<8x9xf32>
    %164 = vector.broadcast %159 : vector<1x9xf32> to vector<8x9xf32>
    %165 = arith.addf %164, %163 : vector<8x9xf32>
    %166 = vector.extract_strided_slice %52 {offsets = [1, 0], sizes = [1, 9], strides = [1, 1]} : vector<2x9xf32> to vector<1x9xf32>
    %167 = vector.broadcast %157 : vector<8x1xf32> to vector<8x9xf32>
    %168 = vector.broadcast %166 : vector<1x9xf32> to vector<8x9xf32>
    %169 = arith.mulf %167, %168 : vector<8x9xf32>
    %170 = arith.addf %165, %169 : vector<8x9xf32>
    %171 = vector.extract_strided_slice %54 {offsets = [3, 0], sizes = [1, 9], strides = [1, 1]} : vector<7x9xf32> to vector<1x9xf32>
    %172 = arith.addf %171, %56 : vector<1x9xf32>
    %173 = vector.extract_strided_slice %55 {offsets = [0, 0], sizes = [1, 9], strides = [1, 1]} : vector<2x9xf32> to vector<1x9xf32>
    %174 = vector.broadcast %156 : vector<8x1xf32> to vector<8x9xf32>
    %175 = vector.broadcast %173 : vector<1x9xf32> to vector<8x9xf32>
    %176 = arith.mulf %174, %175 : vector<8x9xf32>
    %177 = vector.broadcast %172 : vector<1x9xf32> to vector<8x9xf32>
    %178 = arith.addf %177, %176 : vector<8x9xf32>
    %179 = vector.extract_strided_slice %55 {offsets = [1, 0], sizes = [1, 9], strides = [1, 1]} : vector<2x9xf32> to vector<1x9xf32>
    %180 = vector.broadcast %157 : vector<8x1xf32> to vector<8x9xf32>
    %181 = vector.broadcast %179 : vector<1x9xf32> to vector<8x9xf32>
    %182 = arith.mulf %180, %181 : vector<8x9xf32>
    %183 = arith.addf %178, %182 : vector<8x9xf32>
    %184 = arith.mulf %49, %170 : vector<8x9xf32>
    %cst_48 = arith.constant dense<0.000000e+00> : vector<8xf32>
    %185 = vector.multi_reduction <add>, %184, %cst_48 [1] : vector<8x9xf32> to vector<8xf32>
    %186 = vector.shape_cast %185 : vector<8xf32> to vector<8x1xf32>
    %cst_49 = arith.constant 0.333333343 : f32
    %187 = vector.broadcast %cst_49 : f32 to vector<8x1xf32>
    %188 = arith.mulf %186, %187 : vector<8x1xf32>
    %189 = vector.extract_strided_slice %50 {offsets = [0, 8], sizes = [8, 1], strides = [1, 1]} : vector<8x14xf32> to vector<8x1xf32>
    %190 = vector.extract_strided_slice %50 {offsets = [0, 9], sizes = [8, 1], strides = [1, 1]} : vector<8x14xf32> to vector<8x1xf32>
    %191 = vector.extract_strided_slice %51 {offsets = [4, 0], sizes = [1, 9], strides = [1, 1]} : vector<7x9xf32> to vector<1x9xf32>
    %192 = arith.addf %191, %53 : vector<1x9xf32>
    %193 = vector.extract_strided_slice %52 {offsets = [0, 0], sizes = [1, 9], strides = [1, 1]} : vector<2x9xf32> to vector<1x9xf32>
    %194 = vector.broadcast %189 : vector<8x1xf32> to vector<8x9xf32>
    %195 = vector.broadcast %193 : vector<1x9xf32> to vector<8x9xf32>
    %196 = arith.mulf %194, %195 : vector<8x9xf32>
    %197 = vector.broadcast %192 : vector<1x9xf32> to vector<8x9xf32>
    %198 = arith.addf %197, %196 : vector<8x9xf32>
    %199 = vector.extract_strided_slice %52 {offsets = [1, 0], sizes = [1, 9], strides = [1, 1]} : vector<2x9xf32> to vector<1x9xf32>
    %200 = vector.broadcast %190 : vector<8x1xf32> to vector<8x9xf32>
    %201 = vector.broadcast %199 : vector<1x9xf32> to vector<8x9xf32>
    %202 = arith.mulf %200, %201 : vector<8x9xf32>
    %203 = arith.addf %198, %202 : vector<8x9xf32>
    %204 = vector.extract_strided_slice %54 {offsets = [4, 0], sizes = [1, 9], strides = [1, 1]} : vector<7x9xf32> to vector<1x9xf32>
    %205 = arith.addf %204, %56 : vector<1x9xf32>
    %206 = vector.extract_strided_slice %55 {offsets = [0, 0], sizes = [1, 9], strides = [1, 1]} : vector<2x9xf32> to vector<1x9xf32>
    %207 = vector.broadcast %189 : vector<8x1xf32> to vector<8x9xf32>
    %208 = vector.broadcast %206 : vector<1x9xf32> to vector<8x9xf32>
    %209 = arith.mulf %207, %208 : vector<8x9xf32>
    %210 = vector.broadcast %205 : vector<1x9xf32> to vector<8x9xf32>
    %211 = arith.addf %210, %209 : vector<8x9xf32>
    %212 = vector.extract_strided_slice %55 {offsets = [1, 0], sizes = [1, 9], strides = [1, 1]} : vector<2x9xf32> to vector<1x9xf32>
    %213 = vector.broadcast %190 : vector<8x1xf32> to vector<8x9xf32>
    %214 = vector.broadcast %212 : vector<1x9xf32> to vector<8x9xf32>
    %215 = arith.mulf %213, %214 : vector<8x9xf32>
    %216 = arith.addf %211, %215 : vector<8x9xf32>
    %217 = arith.mulf %49, %203 : vector<8x9xf32>
    %cst_50 = arith.constant dense<0.000000e+00> : vector<8xf32>
    %218 = vector.multi_reduction <add>, %217, %cst_50 [1] : vector<8x9xf32> to vector<8xf32>
    %219 = vector.shape_cast %218 : vector<8xf32> to vector<8x1xf32>
    %cst_51 = arith.constant 0.333333343 : f32
    %220 = vector.broadcast %cst_51 : f32 to vector<8x1xf32>
    %221 = arith.mulf %219, %220 : vector<8x1xf32>
    %222 = vector.extract_strided_slice %50 {offsets = [0, 10], sizes = [8, 1], strides = [1, 1]} : vector<8x14xf32> to vector<8x1xf32>
    %223 = vector.extract_strided_slice %50 {offsets = [0, 11], sizes = [8, 1], strides = [1, 1]} : vector<8x14xf32> to vector<8x1xf32>
    %224 = vector.extract_strided_slice %51 {offsets = [5, 0], sizes = [1, 9], strides = [1, 1]} : vector<7x9xf32> to vector<1x9xf32>
    %225 = arith.addf %224, %53 : vector<1x9xf32>
    %226 = vector.extract_strided_slice %52 {offsets = [0, 0], sizes = [1, 9], strides = [1, 1]} : vector<2x9xf32> to vector<1x9xf32>
    %227 = vector.broadcast %222 : vector<8x1xf32> to vector<8x9xf32>
    %228 = vector.broadcast %226 : vector<1x9xf32> to vector<8x9xf32>
    %229 = arith.mulf %227, %228 : vector<8x9xf32>
    %230 = vector.broadcast %225 : vector<1x9xf32> to vector<8x9xf32>
    %231 = arith.addf %230, %229 : vector<8x9xf32>
    %232 = vector.extract_strided_slice %52 {offsets = [1, 0], sizes = [1, 9], strides = [1, 1]} : vector<2x9xf32> to vector<1x9xf32>
    %233 = vector.broadcast %223 : vector<8x1xf32> to vector<8x9xf32>
    %234 = vector.broadcast %232 : vector<1x9xf32> to vector<8x9xf32>
    %235 = arith.mulf %233, %234 : vector<8x9xf32>
    %236 = arith.addf %231, %235 : vector<8x9xf32>
    %237 = vector.extract_strided_slice %54 {offsets = [5, 0], sizes = [1, 9], strides = [1, 1]} : vector<7x9xf32> to vector<1x9xf32>
    %238 = arith.addf %237, %56 : vector<1x9xf32>
    %239 = vector.extract_strided_slice %55 {offsets = [0, 0], sizes = [1, 9], strides = [1, 1]} : vector<2x9xf32> to vector<1x9xf32>
    %240 = vector.broadcast %222 : vector<8x1xf32> to vector<8x9xf32>
    %241 = vector.broadcast %239 : vector<1x9xf32> to vector<8x9xf32>
    %242 = arith.mulf %240, %241 : vector<8x9xf32>
    %243 = vector.broadcast %238 : vector<1x9xf32> to vector<8x9xf32>
    %244 = arith.addf %243, %242 : vector<8x9xf32>
    %245 = vector.extract_strided_slice %55 {offsets = [1, 0], sizes = [1, 9], strides = [1, 1]} : vector<2x9xf32> to vector<1x9xf32>
    %246 = vector.broadcast %223 : vector<8x1xf32> to vector<8x9xf32>
    %247 = vector.broadcast %245 : vector<1x9xf32> to vector<8x9xf32>
    %248 = arith.mulf %246, %247 : vector<8x9xf32>
    %249 = arith.addf %244, %248 : vector<8x9xf32>
    %250 = arith.mulf %49, %236 : vector<8x9xf32>
    %cst_52 = arith.constant dense<0.000000e+00> : vector<8xf32>
    %251 = vector.multi_reduction <add>, %250, %cst_52 [1] : vector<8x9xf32> to vector<8xf32>
    %252 = vector.shape_cast %251 : vector<8xf32> to vector<8x1xf32>
    %cst_53 = arith.constant 0.333333343 : f32
    %253 = vector.broadcast %cst_53 : f32 to vector<8x1xf32>
    %254 = arith.mulf %252, %253 : vector<8x1xf32>
    %255 = vector.extract_strided_slice %50 {offsets = [0, 12], sizes = [8, 1], strides = [1, 1]} : vector<8x14xf32> to vector<8x1xf32>
    %256 = vector.extract_strided_slice %50 {offsets = [0, 13], sizes = [8, 1], strides = [1, 1]} : vector<8x14xf32> to vector<8x1xf32>
    %257 = vector.extract_strided_slice %51 {offsets = [6, 0], sizes = [1, 9], strides = [1, 1]} : vector<7x9xf32> to vector<1x9xf32>
    %258 = arith.addf %257, %53 : vector<1x9xf32>
    %259 = vector.extract_strided_slice %52 {offsets = [0, 0], sizes = [1, 9], strides = [1, 1]} : vector<2x9xf32> to vector<1x9xf32>
    %260 = vector.broadcast %255 : vector<8x1xf32> to vector<8x9xf32>
    %261 = vector.broadcast %259 : vector<1x9xf32> to vector<8x9xf32>
    %262 = arith.mulf %260, %261 : vector<8x9xf32>
    %263 = vector.broadcast %258 : vector<1x9xf32> to vector<8x9xf32>
    %264 = arith.addf %263, %262 : vector<8x9xf32>
    %265 = vector.extract_strided_slice %52 {offsets = [1, 0], sizes = [1, 9], strides = [1, 1]} : vector<2x9xf32> to vector<1x9xf32>
    %266 = vector.broadcast %256 : vector<8x1xf32> to vector<8x9xf32>
    %267 = vector.broadcast %265 : vector<1x9xf32> to vector<8x9xf32>
    %268 = arith.mulf %266, %267 : vector<8x9xf32>
    %269 = arith.addf %264, %268 : vector<8x9xf32>
    %270 = vector.extract_strided_slice %54 {offsets = [6, 0], sizes = [1, 9], strides = [1, 1]} : vector<7x9xf32> to vector<1x9xf32>
    %271 = arith.addf %270, %56 : vector<1x9xf32>
    %272 = vector.extract_strided_slice %55 {offsets = [0, 0], sizes = [1, 9], strides = [1, 1]} : vector<2x9xf32> to vector<1x9xf32>
    %273 = vector.broadcast %255 : vector<8x1xf32> to vector<8x9xf32>
    %274 = vector.broadcast %272 : vector<1x9xf32> to vector<8x9xf32>
    %275 = arith.mulf %273, %274 : vector<8x9xf32>
    %276 = vector.broadcast %271 : vector<1x9xf32> to vector<8x9xf32>
    %277 = arith.addf %276, %275 : vector<8x9xf32>
    %278 = vector.extract_strided_slice %55 {offsets = [1, 0], sizes = [1, 9], strides = [1, 1]} : vector<2x9xf32> to vector<1x9xf32>
    %279 = vector.broadcast %256 : vector<8x1xf32> to vector<8x9xf32>
    %280 = vector.broadcast %278 : vector<1x9xf32> to vector<8x9xf32>
    %281 = arith.mulf %279, %280 : vector<8x9xf32>
    %282 = arith.addf %277, %281 : vector<8x9xf32>
    %283 = arith.mulf %49, %269 : vector<8x9xf32>
    %cst_54 = arith.constant dense<0.000000e+00> : vector<8xf32>
    %284 = vector.multi_reduction <add>, %283, %cst_54 [1] : vector<8x9xf32> to vector<8xf32>
    %285 = vector.shape_cast %284 : vector<8xf32> to vector<8x1xf32>
    %cst_55 = arith.constant 0.333333343 : f32
    %286 = vector.broadcast %cst_55 : f32 to vector<8x1xf32>
    %287 = arith.mulf %285, %286 : vector<8x1xf32>
    %288 = tpu.concatenate %89, %122, %155, %188, %221, %254, %287 in 1 : vector<8x1xf32>, vector<8x1xf32>, vector<8x1xf32>, vector<8x1xf32>, vector<8x1xf32>, vector<8x1xf32>, vector<8x1xf32> -> vector<8x7xf32>
    %cst_56 = arith.constant dense<0xFF800000> : vector<8xf32>
    %289 = vector.multi_reduction <maximumf>, %288, %cst_56 [1] : vector<8x7xf32> to vector<8xf32>
    %290 = vector.shape_cast %289 : vector<8xf32> to vector<8x1xf32>
    %291 = vector.broadcast %290 : vector<8x1xf32> to vector<8x7xf32>
    %292 = arith.subf %288, %291 : vector<8x7xf32>
    %293 = math.exp %292 : vector<8x7xf32>
    %cst_57 = arith.constant dense<0.000000e+00> : vector<8xf32>
    %294 = vector.multi_reduction <add>, %293, %cst_57 [1] : vector<8x7xf32> to vector<8xf32>
    %295 = vector.shape_cast %294 : vector<8xf32> to vector<8x1xf32>
    %296 = tpu.reciprocal %295 {approx = true} : vector<8x1xf32> -> vector<8x1xf32>
    %297 = vector.broadcast %296 : vector<8x1xf32> to vector<8x7xf32>
    %298 = arith.mulf %293, %297 : vector<8x7xf32>
    %299 = vector.extract_strided_slice %298 {offsets = [0, 0], sizes = [8, 1], strides = [1, 1]} : vector<8x7xf32> to vector<8x1xf32>
    %300 = vector.broadcast %299 : vector<8x1xf32> to vector<8x9xf32>
    %301 = arith.mulf %300, %84 : vector<8x9xf32>
    %302 = vector.extract_strided_slice %298 {offsets = [0, 1], sizes = [8, 1], strides = [1, 1]} : vector<8x7xf32> to vector<8x1xf32>
    %303 = vector.broadcast %302 : vector<8x1xf32> to vector<8x9xf32>
    %304 = arith.mulf %303, %117 : vector<8x9xf32>
    %305 = arith.addf %301, %304 : vector<8x9xf32>
    %306 = vector.extract_strided_slice %298 {offsets = [0, 2], sizes = [8, 1], strides = [1, 1]} : vector<8x7xf32> to vector<8x1xf32>
    %307 = vector.broadcast %306 : vector<8x1xf32> to vector<8x9xf32>
    %308 = arith.mulf %307, %150 : vector<8x9xf32>
    %309 = arith.addf %305, %308 : vector<8x9xf32>
    %310 = vector.extract_strided_slice %298 {offsets = [0, 3], sizes = [8, 1], strides = [1, 1]} : vector<8x7xf32> to vector<8x1xf32>
    %311 = vector.broadcast %310 : vector<8x1xf32> to vector<8x9xf32>
    %312 = arith.mulf %311, %183 : vector<8x9xf32>
    %313 = arith.addf %309, %312 : vector<8x9xf32>
    %314 = vector.extract_strided_slice %298 {offsets = [0, 4], sizes = [8, 1], strides = [1, 1]} : vector<8x7xf32> to vector<8x1xf32>
    %315 = vector.broadcast %314 : vector<8x1xf32> to vector<8x9xf32>
    %316 = arith.mulf %315, %216 : vector<8x9xf32>
    %317 = arith.addf %313, %316 : vector<8x9xf32>
    %318 = vector.extract_strided_slice %298 {offsets = [0, 5], sizes = [8, 1], strides = [1, 1]} : vector<8x7xf32> to vector<8x1xf32>
    %319 = vector.broadcast %318 : vector<8x1xf32> to vector<8x9xf32>
    %320 = arith.mulf %319, %249 : vector<8x9xf32>
    %321 = arith.addf %317, %320 : vector<8x9xf32>
    %322 = vector.extract_strided_slice %298 {offsets = [0, 6], sizes = [8, 1], strides = [1, 1]} : vector<8x7xf32> to vector<8x1xf32>
    %323 = vector.broadcast %322 : vector<8x1xf32> to vector<8x9xf32>
    %324 = arith.mulf %323, %282 : vector<8x9xf32>
    %325 = arith.addf %321, %324 : vector<8x9xf32>
    %c0_58 = arith.constant 0 : index
    %c0_59 = arith.constant 0 : index
    %326 = vector.load %arg17[%c0_58, %c0_59] : memref<9x9xf32, #tpu.memory_space<vmem>>, vector<9x9xf32>
    %cst_60 = arith.constant dense<0.000000e+00> : vector<8x9xf32>
    %327 = tpu.matmul %325, %326, %cst_60 {dimension_numbers = #tpu.dot_dimension_numbers<[1], [0], [0], [1], [0, 0, 1, 1], [], []>} : vector<8x9xf32>, vector<9x9xf32>, vector<8x9xf32> -> vector<8x9xf32>
    %c0_61 = arith.constant 0 : index
    %c0_62 = arith.constant 0 : index
    %328 = vector.load %arg18[%c0_61, %c0_62] : memref<1x9xf32, #tpu.memory_space<vmem>>, vector<1x9xf32>
    %329 = vector.broadcast %328 : vector<1x9xf32> to vector<8x9xf32>
    %330 = arith.addf %327, %329 : vector<8x9xf32>
    %331 = vector.extract_strided_slice %330 {offsets = [0, 0], sizes = [8, 2], strides = [1, 1]} : vector<8x9xf32> to vector<8x2xf32>
    %332 = arith.mulf %331, %331 : vector<8x2xf32>
    %cst_63 = arith.constant dense<0.000000e+00> : vector<8xf32>
    %333 = vector.multi_reduction <add>, %332, %cst_63 [1] : vector<8x2xf32> to vector<8xf32>
    %334 = vector.shape_cast %333 : vector<8xf32> to vector<8x1xf32>
    %335 = math.sqrt %334 : vector<8x1xf32>
    %cst_64 = arith.constant 9.99999996E-13 : f32
    %336 = vector.broadcast %cst_64 : f32 to vector<8x1xf32>
    %337 = arith.maximumf %335, %336 : vector<8x1xf32>
    %338 = vector.broadcast %337 : vector<8x1xf32> to vector<8x2xf32>
    %339 = arith.divf %331, %338 : vector<8x2xf32>
    %cst_65 = arith.constant 3.000000e+00 : f32
    %340 = vector.broadcast %cst_65 : f32 to vector<8x2xf32>
    %341 = arith.mulf %339, %340 : vector<8x2xf32>
    %342 = tpu.concatenate %1, %341 in 1 : vector<8x12xf32>, vector<8x2xf32> -> vector<8x14xf32>
    %343 = tpu.concatenate %1, %3 in 1 : vector<8x12xf32>, vector<8x2xf32> -> vector<8x14xf32>
    %344 = tpu.concatenate %1, %2, %3, %341 in 1 : vector<8x12xf32>, vector<8x14xf32>, vector<8x2xf32>, vector<8x2xf32> -> vector<8x30xf32>
    %345 = tpu.concatenate %342, %343, %344 in 1 : vector<8x14xf32>, vector<8x14xf32>, vector<8x30xf32> -> vector<8x58xf32>
    %c0_66 = arith.constant 0 : index
    %c0_67 = arith.constant 0 : index
    %346 = vector.load %arg19[%c0_66, %c0_67] : memref<58x128xf32, #tpu.memory_space<vmem>>, vector<58x128xf32>
    %cst_68 = arith.constant dense<0.000000e+00> : vector<8x128xf32>
    %347 = tpu.matmul %345, %346, %cst_68 {dimension_numbers = #tpu.dot_dimension_numbers<[1], [0], [0], [1], [0, 0, 1, 1], [], []>} : vector<8x58xf32>, vector<58x128xf32>, vector<8x128xf32> -> vector<8x128xf32>
    %c0_69 = arith.constant 0 : index
    %c0_70 = arith.constant 0 : index
    %348 = vector.load %arg20[%c0_69, %c0_70] : memref<1x128xf32, #tpu.memory_space<vmem>>, vector<1x128xf32>
    %349 = vector.broadcast %348 : vector<1x128xf32> to vector<8x128xf32>
    %350 = arith.addf %347, %349 : vector<8x128xf32>
    %cst_71 = arith.constant 0.000000e+00 : f32
    %351 = vector.broadcast %cst_71 : f32 to vector<8x128xf32>
    %352 = arith.cmpf ogt, %350, %351 : vector<8x128xf32>
    %cst_72 = arith.constant 0.000000e+00 : f32
    %353 = vector.broadcast %cst_72 : f32 to vector<8x128xf32>
    %354 = arith.minimumf %350, %353 : vector<8x128xf32>
    %355 = math.exp %354 : vector<8x128xf32>
    %cst_73 = arith.constant 1.000000e+00 : f32
    %356 = vector.broadcast %cst_73 : f32 to vector<8x128xf32>
    %357 = arith.subf %355, %356 : vector<8x128xf32>
    %358 = arith.select %352, %350, %357 : vector<8x128xi1>, vector<8x128xf32>
    %c0_74 = arith.constant 0 : index
    %c0_75 = arith.constant 0 : index
    %359 = vector.load %arg21[%c0_74, %c0_75] : memref<128x96xf32, #tpu.memory_space<vmem>>, vector<128x96xf32>
    %cst_76 = arith.constant dense<0.000000e+00> : vector<8x96xf32>
    %360 = tpu.matmul %358, %359, %cst_76 {dimension_numbers = #tpu.dot_dimension_numbers<[1], [0], [0], [1], [0, 0, 1, 1], [], []>} : vector<8x128xf32>, vector<128x96xf32>, vector<8x96xf32> -> vector<8x96xf32>
    %c0_77 = arith.constant 0 : index
    %c0_78 = arith.constant 0 : index
    %361 = vector.load %arg22[%c0_77, %c0_78] : memref<1x96xf32, #tpu.memory_space<vmem>>, vector<1x96xf32>
    %362 = vector.broadcast %361 : vector<1x96xf32> to vector<8x96xf32>
    %363 = arith.addf %360, %362 : vector<8x96xf32>
    %cst_79 = arith.constant 0.000000e+00 : f32
    %364 = vector.broadcast %cst_79 : f32 to vector<8x96xf32>
    %365 = arith.cmpf ogt, %363, %364 : vector<8x96xf32>
    %cst_80 = arith.constant 0.000000e+00 : f32
    %366 = vector.broadcast %cst_80 : f32 to vector<8x96xf32>
    %367 = arith.minimumf %363, %366 : vector<8x96xf32>
    %368 = math.exp %367 : vector<8x96xf32>
    %cst_81 = arith.constant 1.000000e+00 : f32
    %369 = vector.broadcast %cst_81 : f32 to vector<8x96xf32>
    %370 = arith.subf %368, %369 : vector<8x96xf32>
    %371 = arith.select %365, %363, %370 : vector<8x96xi1>, vector<8x96xf32>
    %372 = vector.extract_strided_slice %358 {offsets = [0, 96], sizes = [8, 32], strides = [1, 1]} : vector<8x128xf32> to vector<8x32xf32>
    %373 = tpu.concatenate %371, %372 in 1 : vector<8x96xf32>, vector<8x32xf32> -> vector<8x128xf32>
    %c0_82 = arith.constant 0 : index
    %c0_83 = arith.constant 0 : index
    %374 = vector.load %arg23[%c0_82, %c0_83] : memref<128x50xf32, #tpu.memory_space<vmem>>, vector<128x50xf32>
    %cst_84 = arith.constant dense<0.000000e+00> : vector<8x50xf32>
    %375 = tpu.matmul %373, %374, %cst_84 {dimension_numbers = #tpu.dot_dimension_numbers<[1], [0], [0], [1], [0, 0, 1, 1], [], []>} : vector<8x128xf32>, vector<128x50xf32>, vector<8x50xf32> -> vector<8x50xf32>
    %c0_85 = arith.constant 0 : index
    %c0_86 = arith.constant 0 : index
    %376 = vector.load %arg24[%c0_85, %c0_86] : memref<1x50xf32, #tpu.memory_space<vmem>>, vector<1x50xf32>
    %377 = vector.broadcast %376 : vector<1x50xf32> to vector<8x50xf32>
    %378 = arith.addf %375, %377 : vector<8x50xf32>
    %379 = vector.extract_strided_slice %378 {offsets = [0, 0], sizes = [8, 8], strides = [1, 1]} : vector<8x50xf32> to vector<8x8xf32>
    %380 = vector.extract_strided_slice %378 {offsets = [0, 8], sizes = [8, 8], strides = [1, 1]} : vector<8x50xf32> to vector<8x8xf32>
    %381 = math.absf %380 : vector<8x8xf32>
    %382 = vector.extract_strided_slice %378 {offsets = [0, 16], sizes = [8, 8], strides = [1, 1]} : vector<8x50xf32> to vector<8x8xf32>
    %383 = vector.extract_strided_slice %378 {offsets = [0, 24], sizes = [8, 8], strides = [1, 1]} : vector<8x50xf32> to vector<8x8xf32>
    %384 = math.absf %383 : vector<8x8xf32>
    %385 = vector.extract_strided_slice %378 {offsets = [0, 32], sizes = [8, 8], strides = [1, 1]} : vector<8x50xf32> to vector<8x8xf32>
    %386 = vector.extract_strided_slice %378 {offsets = [0, 40], sizes = [8, 8], strides = [1, 1]} : vector<8x50xf32> to vector<8x8xf32>
    %387 = math.absf %386 : vector<8x8xf32>
    %388 = vector.extract_strided_slice %378 {offsets = [0, 48], sizes = [8, 2], strides = [1, 1]} : vector<8x50xf32> to vector<8x2xf32>
    %cst_87 = arith.constant dense<0xFF800000> : vector<8xf32>
    %389 = vector.multi_reduction <maximumf>, %388, %cst_87 [1] : vector<8x2xf32> to vector<8xf32>
    %390 = vector.shape_cast %389 : vector<8xf32> to vector<8x1xf32>
    %391 = vector.broadcast %390 : vector<8x1xf32> to vector<8x2xf32>
    %392 = arith.subf %388, %391 : vector<8x2xf32>
    %393 = math.exp %392 : vector<8x2xf32>
    %cst_88 = arith.constant dense<0.000000e+00> : vector<8xf32>
    %394 = vector.multi_reduction <add>, %393, %cst_88 [1] : vector<8x2xf32> to vector<8xf32>
    %395 = vector.shape_cast %394 : vector<8xf32> to vector<8x1xf32>
    %396 = tpu.reciprocal %395 {approx = true} : vector<8x1xf32> -> vector<8x1xf32>
    %397 = vector.broadcast %396 : vector<8x1xf32> to vector<8x2xf32>
    %398 = arith.mulf %393, %397 : vector<8x2xf32>
    %399 = vector.extract_strided_slice %398 {offsets = [0, 0], sizes = [8, 1], strides = [1, 1]} : vector<8x2xf32> to vector<8x1xf32>
    %cst_89 = arith.constant 0.00999999977 : f32
    %400 = vector.broadcast %cst_89 : f32 to vector<8x8xf32>
    %401 = arith.addf %381, %400 : vector<8x8xf32>
    %402 = vector.broadcast %399 : vector<8x1xf32> to vector<8x8xf32>
    %403 = arith.divf %402, %401 : vector<8x8xf32>
    %404 = vector.extract_strided_slice %398 {offsets = [0, 1], sizes = [8, 1], strides = [1, 1]} : vector<8x2xf32> to vector<8x1xf32>
    %cst_90 = arith.constant 0.00999999977 : f32
    %405 = vector.broadcast %cst_90 : f32 to vector<8x8xf32>
    %406 = arith.addf %384, %405 : vector<8x8xf32>
    %407 = vector.broadcast %404 : vector<8x1xf32> to vector<8x8xf32>
    %408 = arith.divf %407, %406 : vector<8x8xf32>
    %409 = arith.addf %403, %408 : vector<8x8xf32>
    %410 = tpu.reciprocal %409 {approx = true} : vector<8x8xf32> -> vector<8x8xf32>
    %411 = arith.mulf %379, %403 : vector<8x8xf32>
    %412 = arith.mulf %382, %408 : vector<8x8xf32>
    %413 = arith.addf %411, %412 : vector<8x8xf32>
    %414 = arith.mulf %410, %413 : vector<8x8xf32>
    %415 = vector.extract_strided_slice %44 {offsets = [0, 0], sizes = [8, 1], strides = [1, 1]} : vector<8x2xf32> to vector<8x1xf32>
    %cst_91 = arith.constant 0.00999999977 : f32
    %416 = vector.broadcast %cst_91 : f32 to vector<8x8xf32>
    %417 = arith.addf %410, %416 : vector<8x8xf32>
    %418 = vector.broadcast %415 : vector<8x1xf32> to vector<8x8xf32>
    %419 = arith.divf %418, %417 : vector<8x8xf32>
    %420 = vector.extract_strided_slice %44 {offsets = [0, 1], sizes = [8, 1], strides = [1, 1]} : vector<8x2xf32> to vector<8x1xf32>
    %cst_92 = arith.constant 0.00999999977 : f32
    %421 = vector.broadcast %cst_92 : f32 to vector<8x8xf32>
    %422 = arith.addf %387, %421 : vector<8x8xf32>
    %423 = vector.broadcast %420 : vector<8x1xf32> to vector<8x8xf32>
    %424 = arith.divf %423, %422 : vector<8x8xf32>
    %425 = arith.addf %419, %424 : vector<8x8xf32>
    %426 = tpu.reciprocal %425 {approx = true} : vector<8x8xf32> -> vector<8x8xf32>
    %427 = arith.mulf %414, %419 : vector<8x8xf32>
    %428 = arith.mulf %385, %424 : vector<8x8xf32>
    %429 = arith.addf %427, %428 : vector<8x8xf32>
    %430 = arith.mulf %426, %429 : vector<8x8xf32>
    %c0_93 = arith.constant 0 : index
    %c0_94 = arith.constant 0 : index
    %431 = vector.load %arg25[%c0_93, %c0_94] : memref<8x8xf32, #tpu.memory_space<vmem>>, vector<8x8xf32>
    tpu.vector_store %arg25[%c0_93, %c0_94], %430 {strides = array<i32>} : memref<8x8xf32, #tpu.memory_space<vmem>>, vector<8x8xf32>,
    return
  }
  func.func @transform_0(%arg0: i32) -> (i32, i32) {
    %c0_i32 = arith.constant 0 : i32
    %c0_i32_0 = arith.constant 0 : i32
    return %arg0, %c0_i32 : i32, i32
  }
  func.func @transform_1(%arg0: i32) -> (i32, i32) {
    %c0_i32 = arith.constant 0 : i32
    %c0_i32_0 = arith.constant 0 : i32
    return %arg0, %c0_i32 : i32, i32
  }
  func.func @transform_2(%arg0: i32) -> (i32, i32) {
    %c0_i32 = arith.constant 0 : i32
    %c0_i32_0 = arith.constant 0 : i32
    %c0_i32_1 = arith.constant 0 : i32
    return %c0_i32, %c0_i32_0 : i32, i32
  }
  func.func @transform_3(%arg0: i32) -> (i32, i32) {
    %c0_i32 = arith.constant 0 : i32
    %c0_i32_0 = arith.constant 0 : i32
    %c0_i32_1 = arith.constant 0 : i32
    return %c0_i32, %c0_i32_0 : i32, i32
  }
  func.func @transform_4(%arg0: i32) -> (i32, i32) {
    %c0_i32 = arith.constant 0 : i32
    %c0_i32_0 = arith.constant 0 : i32
    %c0_i32_1 = arith.constant 0 : i32
    return %c0_i32, %c0_i32_0 : i32, i32
  }
  func.func @transform_5(%arg0: i32) -> (i32, i32) {
    %c0_i32 = arith.constant 0 : i32
    %c0_i32_0 = arith.constant 0 : i32
    %c0_i32_1 = arith.constant 0 : i32
    return %c0_i32, %c0_i32_0 : i32, i32
  }
  func.func @transform_6(%arg0: i32) -> (i32, i32) {
    %c0_i32 = arith.constant 0 : i32
    %c0_i32_0 = arith.constant 0 : i32
    %c0_i32_1 = arith.constant 0 : i32
    return %c0_i32, %c0_i32_0 : i32, i32
  }
  func.func @transform_7(%arg0: i32) -> (i32, i32) {
    %c0_i32 = arith.constant 0 : i32
    %c0_i32_0 = arith.constant 0 : i32
    %c0_i32_1 = arith.constant 0 : i32
    return %c0_i32, %c0_i32_0 : i32, i32
  }
  func.func @transform_8(%arg0: i32) -> (i32, i32) {
    %c0_i32 = arith.constant 0 : i32
    %c0_i32_0 = arith.constant 0 : i32
    %c0_i32_1 = arith.constant 0 : i32
    return %c0_i32, %c0_i32_0 : i32, i32
  }
  func.func @transform_9(%arg0: i32) -> (i32, i32) {
    %c0_i32 = arith.constant 0 : i32
    %c0_i32_0 = arith.constant 0 : i32
    %c0_i32_1 = arith.constant 0 : i32
    return %c0_i32, %c0_i32_0 : i32, i32
  }
  func.func @transform_10(%arg0: i32) -> (i32, i32) {
    %c0_i32 = arith.constant 0 : i32
    %c0_i32_0 = arith.constant 0 : i32
    %c0_i32_1 = arith.constant 0 : i32
    return %c0_i32, %c0_i32_0 : i32, i32
  }
  func.func @transform_11(%arg0: i32) -> (i32, i32) {
    %c0_i32 = arith.constant 0 : i32
    %c0_i32_0 = arith.constant 0 : i32
    %c0_i32_1 = arith.constant 0 : i32
    return %c0_i32, %c0_i32_0 : i32, i32
  }
  func.func @transform_12(%arg0: i32) -> (i32, i32) {
    %c0_i32 = arith.constant 0 : i32
    %c0_i32_0 = arith.constant 0 : i32
    %c0_i32_1 = arith.constant 0 : i32
    return %c0_i32, %c0_i32_0 : i32, i32
  }
  func.func @transform_13(%arg0: i32) -> (i32, i32) {
    %c0_i32 = arith.constant 0 : i32
    %c0_i32_0 = arith.constant 0 : i32
    %c0_i32_1 = arith.constant 0 : i32
    return %c0_i32, %c0_i32_0 : i32, i32
  }
  func.func @transform_14(%arg0: i32) -> (i32, i32) {
    %c0_i32 = arith.constant 0 : i32
    %c0_i32_0 = arith.constant 0 : i32
    %c0_i32_1 = arith.constant 0 : i32
    return %c0_i32, %c0_i32_0 : i32, i32
  }
  func.func @transform_15(%arg0: i32) -> (i32, i32) {
    %c0_i32 = arith.constant 0 : i32
    %c0_i32_0 = arith.constant 0 : i32
    %c0_i32_1 = arith.constant 0 : i32
    return %c0_i32, %c0_i32_0 : i32, i32
  }
  func.func @transform_16(%arg0: i32) -> (i32, i32) {
    %c0_i32 = arith.constant 0 : i32
    %c0_i32_0 = arith.constant 0 : i32
    %c0_i32_1 = arith.constant 0 : i32
    return %c0_i32, %c0_i32_0 : i32, i32
  }
  func.func @transform_17(%arg0: i32) -> (i32, i32) {
    %c0_i32 = arith.constant 0 : i32
    %c0_i32_0 = arith.constant 0 : i32
    %c0_i32_1 = arith.constant 0 : i32
    return %c0_i32, %c0_i32_0 : i32, i32
  }
  func.func @transform_18(%arg0: i32) -> (i32, i32) {
    %c0_i32 = arith.constant 0 : i32
    %c0_i32_0 = arith.constant 0 : i32
    %c0_i32_1 = arith.constant 0 : i32
    return %c0_i32, %c0_i32_0 : i32, i32
  }
  func.func @transform_19(%arg0: i32) -> (i32, i32) {
    %c0_i32 = arith.constant 0 : i32
    %c0_i32_0 = arith.constant 0 : i32
    %c0_i32_1 = arith.constant 0 : i32
    return %c0_i32, %c0_i32_0 : i32, i32
  }
  func.func @transform_20(%arg0: i32) -> (i32, i32) {
    %c0_i32 = arith.constant 0 : i32
    %c0_i32_0 = arith.constant 0 : i32
    %c0_i32_1 = arith.constant 0 : i32
    return %c0_i32, %c0_i32_0 : i32, i32
  }
  func.func @transform_21(%arg0: i32) -> (i32, i32) {
    %c0_i32 = arith.constant 0 : i32
    %c0_i32_0 = arith.constant 0 : i32
    %c0_i32_1 = arith.constant 0 : i32
    return %c0_i32, %c0_i32_0 : i32, i32
  }
  func.func @transform_22(%arg0: i32) -> (i32, i32) {
    %c0_i32 = arith.constant 0 : i32
    %c0_i32_0 = arith.constant 0 : i32
    %c0_i32_1 = arith.constant 0 : i32
    return %c0_i32, %c0_i32_0 : i32, i32
  }
  func.func @transform_23(%arg0: i32) -> (i32, i32) {
    %c0_i32 = arith.constant 0 : i32
    %c0_i32_0 = arith.constant 0 : i32
    %c0_i32_1 = arith.constant 0 : i32
    return %c0_i32, %c0_i32_0 : i32, i32
  }
  func.func @transform_24(%arg0: i32) -> (i32, i32) {
    %c0_i32 = arith.constant 0 : i32
    %c0_i32_0 = arith.constant 0 : i32
    return %arg0, %c0_i32 : i32, i32
  }
}

</mosaic_0001>

<llo_original>
// kernel: act_inference.1
$region0: #{act_inference.1}
  #allocation0 [shape = 'u32[]', space=smem, size = 0x4, offset = 0x4, fixed_abs, tag = 'smem constant byte address 0x4 - core index']
  #allocation1 [shape = 'u32[144,128]{1,0:T(1,128)}', space=vmem, size = 0x12000, scoped, tag = 'internal scratch']
  %s0 = inlined_call_operand.vmem [shape: f32[8,28], index: 0, kind: input, shape index: {}]
  %s1 = inlined_call_operand.vmem [shape: f32[8,14], index: 1, kind: input, shape index: {}]
  %s2 = inlined_call_operand.vmem [shape: f32[28,32], index: 2, kind: input, shape index: {}]
  %s3 = inlined_call_operand.vmem [shape: f32[1,32], index: 3, kind: input, shape index: {}]
  %s4 = inlined_call_operand.vmem [shape: f32[32,32], index: 4, kind: input, shape index: {}]
  %s5 = inlined_call_operand.vmem [shape: f32[1,32], index: 5, kind: input, shape index: {}]
  %s6 = inlined_call_operand.vmem [shape: f32[32,2], index: 6, kind: input, shape index: {}]
  %s7 = inlined_call_operand.vmem [shape: f32[1,2], index: 7, kind: input, shape index: {}]
  %s8 = inlined_call_operand.vmem [shape: f32[2,9], index: 8, kind: input, shape index: {}]
  %s9 = inlined_call_operand.vmem [shape: f32[1,9], index: 9, kind: input, shape index: {}]
  %s10 = inlined_call_operand.vmem [shape: f32[7,9], index: 10, kind: input, shape index: {}]
  %s11 = inlined_call_operand.vmem [shape: f32[2,9], index: 11, kind: input, shape index: {}]
  %s12 = inlined_call_operand.vmem [shape: f32[1,9], index: 12, kind: input, shape index: {}]
  %s13 = inlined_call_operand.vmem [shape: f32[7,9], index: 13, kind: input, shape index: {}]
  %s14 = inlined_call_operand.vmem [shape: f32[2,9], index: 14, kind: input, shape index: {}]
  %s15 = inlined_call_operand.vmem [shape: f32[1,9], index: 15, kind: input, shape index: {}]
  %s16 = inlined_call_operand.vmem [shape: f32[9,9], index: 16, kind: input, shape index: {}]
  %s17 = inlined_call_operand.vmem [shape: f32[1,9], index: 17, kind: input, shape index: {}]
  %s18 = inlined_call_operand.vmem [shape: f32[58,128], index: 18, kind: input, shape index: {}]
  %s19 = inlined_call_operand.vmem [shape: f32[1,128], index: 19, kind: input, shape index: {}]
  %s20 = inlined_call_operand.vmem [shape: f32[128,96], index: 20, kind: input, shape index: {}]
  %s21 = inlined_call_operand.vmem [shape: f32[1,96], index: 21, kind: input, shape index: {}]
  %s22 = inlined_call_operand.vmem [shape: f32[128,50], index: 22, kind: input, shape index: {}]
  %s23 = inlined_call_operand.vmem [shape: f32[1,50], index: 23, kind: input, shape index: {}]
  %s24 = inlined_call_operand.vmem [shape: f32[8,8], index: 24, kind: output, shape index: {}]
  %s25 = sld [smem:[#allocation0]]
  $region106: #{act_inference.1} parent=0
    _
  %s27 = ssub.s32 1, %s25
  %s28 = scalar_select 0, %s27, %s25
  // Predicated region
  $region2: #{act_inference.1} parent=0 // pred_check
    _
  $region3: #{act_inference.1} parent=0 // pred_check_branch
    %30 = sbr.rel (0) target = $region5
  $region4: #{act_inference.1} parent=0 // pred_region
    _
  $region5: #{act_inference.1} parent=0 // pred_fallthru
    _
  // Predicated region
  $region6: #{act_inference.1} parent=0 // pred_check
    _
  $region7: #{act_inference.1} parent=0 // pred_check_branch
    %32 = sbr.rel (0) target = $region9
  $region8: #{act_inference.1} parent=0 // pred_region
    _
  $region9: #{act_inference.1} parent=0 // pred_fallthru
    _
  // Predicated region
  $region10: #{act_inference.1} parent=0 // pred_check
    _
  $region11: #{act_inference.1} parent=0 // pred_check_branch
    %34 = sbr.rel (0) target = $region13
  $region12: #{act_inference.1} parent=0 // pred_region
    _
  $region13: #{act_inference.1} parent=0 // pred_fallthru
    _
  // Predicated region
  $region14: #{act_inference.1} parent=0 // pred_check
    _
  $region15: #{act_inference.1} parent=0 // pred_check_branch
    %36 = sbr.rel (0) target = $region17
  $region16: #{act_inference.1} parent=0 // pred_region
    _
  $region17: #{act_inference.1} parent=0 // pred_fallthru
    _
  // Predicated region
  $region18: #{act_inference.1} parent=0 // pred_check
    _
  $region19: #{act_inference.1} parent=0 // pred_check_branch
    %38 = sbr.rel (0) target = $region21
  $region20: #{act_inference.1} parent=0 // pred_region
    _
  $region21: #{act_inference.1} parent=0 // pred_fallthru
    _
  // Predicated region
  $region22: #{act_inference.1} parent=0 // pred_check
    _
  $region23: #{act_inference.1} parent=0 // pred_check_branch
    %40 = sbr.rel (0) target = $region25
  $region24: #{act_inference.1} parent=0 // pred_region
    _
  $region25: #{act_inference.1} parent=0 // pred_fallthru
    _
  // Predicated region
  $region26: #{act_inference.1} parent=0 // pred_check
    _
  $region27: #{act_inference.1} parent=0 // pred_check_branch
    %42 = sbr.rel (0) target = $region29
  $region28: #{act_inference.1} parent=0 // pred_region
    _
  $region29: #{act_inference.1} parent=0 // pred_fallthru
    _
  // Predicated region
  $region30: #{act_inference.1} parent=0 // pred_check
    _
  $region31: #{act_inference.1} parent=0 // pred_check_branch
    %44 = sbr.rel (0) target = $region33
  $region32: #{act_inference.1} parent=0 // pred_region
    _
  $region33: #{act_inference.1} parent=0 // pred_fallthru
    _
  // Predicated region
  $region34: #{act_inference.1} parent=0 // pred_check
    _
  $region35: #{act_inference.1} parent=0 // pred_check_branch
    %46 = sbr.rel (0) target = $region37
  $region36: #{act_inference.1} parent=0 // pred_region
    _
  $region37: #{act_inference.1} parent=0 // pred_fallthru
    _
  // Predicated region
  $region38: #{act_inference.1} parent=0 // pred_check
    _
  $region39: #{act_inference.1} parent=0 // pred_check_branch
    %48 = sbr.rel (0) target = $region41
  $region40: #{act_inference.1} parent=0 // pred_region
    _
  $region41: #{act_inference.1} parent=0 // pred_fallthru
    _
  // Predicated region
  $region42: #{act_inference.1} parent=0 // pred_check
    _
  $region43: #{act_inference.1} parent=0 // pred_check_branch
    %50 = sbr.rel (0) target = $region45
  $region44: #{act_inference.1} parent=0 // pred_region
    _
  $region45: #{act_inference.1} parent=0 // pred_fallthru
    _
  // Predicated region
  $region46: #{act_inference.1} parent=0 // pred_check
    _
  $region47: #{act_inference.1} parent=0 // pred_check_branch
    %52 = sbr.rel (0) target = $region49
  $region48: #{act_inference.1} parent=0 // pred_region
    _
  $region49: #{act_inference.1} parent=0 // pred_fallthru
    _
  // Predicated region
  $region50: #{act_inference.1} parent=0 // pred_check
    _
  $region51: #{act_inference.1} parent=0 // pred_check_branch
    %54 = sbr.rel (0) target = $region53
  $region52: #{act_inference.1} parent=0 // pred_region
    _
  $region53: #{act_inference.1} parent=0 // pred_fallthru
    _
  // Predicated region
  $region54: #{act_inference.1} parent=0 // pred_check
    _
  $region55: #{act_inference.1} parent=0 // pred_check_branch
    %56 = sbr.rel (0) target = $region57
  $region56: #{act_inference.1} parent=0 // pred_region
    _
  $region57: #{act_inference.1} parent=0 // pred_fallthru
    _
  // Predicated region
  $region58: #{act_inference.1} parent=0 // pred_check
    _
  $region59: #{act_inference.1} parent=0 // pred_check_branch
    %58 = sbr.rel (0) target = $region61
  $region60: #{act_inference.1} parent=0 // pred_region
    _
  $region61: #{act_inference.1} parent=0 // pred_fallthru
    _
  // Predicated region
  $region62: #{act_inference.1} parent=0 // pred_check
    _
  $region63: #{act_inference.1} parent=0 // pred_check_branch
    %60 = sbr.rel (0) target = $region65
  $region64: #{act_inference.1} parent=0 // pred_region
    _
  $region65: #{act_inference.1} parent=0 // pred_fallthru
    _
  // Predicated region
  $region66: #{act_inference.1} parent=0 // pred_check
    _
  $region67: #{act_inference.1} parent=0 // pred_check_branch
    %62 = sbr.rel (0) target = $region69
  $region68: #{act_inference.1} parent=0 // pred_region
    _
  $region69: #{act_inference.1} parent=0 // pred_fallthru
    _
  // Predicated region
  $region70: #{act_inference.1} parent=0 // pred_check
    _
  $region71: #{act_inference.1} parent=0 // pred_check_branch
    %64 = sbr.rel (0) target = $region73
  $region72: #{act_inference.1} parent=0 // pred_region
    _
  $region73: #{act_inference.1} parent=0 // pred_fallthru
    _
  // Predicated region
  $region74: #{act_inference.1} parent=0 // pred_check
    _
  $region75: #{act_inference.1} parent=0 // pred_check_branch
    %66 = sbr.rel (0) target = $region77
  $region76: #{act_inference.1} parent=0 // pred_region
    _
  $region77: #{act_inference.1} parent=0 // pred_fallthru
    _
  // Predicated region
  $region78: #{act_inference.1} parent=0 // pred_check
    _
  $region79: #{act_inference.1} parent=0 // pred_check_branch
    %68 = sbr.rel (0) target = $region81
  $region80: #{act_inference.1} parent=0 // pred_region
    _
  $region81: #{act_inference.1} parent=0 // pred_fallthru
    _
  // Predicated region
  $region82: #{act_inference.1} parent=0 // pred_check
    _
  $region83: #{act_inference.1} parent=0 // pred_check_branch
    %70 = sbr.rel (0) target = $region85
  $region84: #{act_inference.1} parent=0 // pred_region
    _
  $region85: #{act_inference.1} parent=0 // pred_fallthru
    _
  // Predicated region
  $region86: #{act_inference.1} parent=0 // pred_check
    _
  $region87: #{act_inference.1} parent=0 // pred_check_branch
    %72 = sbr.rel (0) target = $region89
  $region88: #{act_inference.1} parent=0 // pred_region
    _
  $region89: #{act_inference.1} parent=0 // pred_fallthru
    _
  // Predicated region
  $region90: #{act_inference.1} parent=0 // pred_check
    _
  $region91: #{act_inference.1} parent=0 // pred_check_branch
    %74 = sbr.rel (0) target = $region93
  $region92: #{act_inference.1} parent=0 // pred_region
    _
  $region93: #{act_inference.1} parent=0 // pred_fallthru
    _
  // Predicated region
  $region94: #{act_inference.1} parent=0 // pred_check
    _
  $region95: #{act_inference.1} parent=0 // pred_check_branch
    %76 = sbr.rel (0) target = $region97
  $region96: #{act_inference.1} parent=0 // pred_region
    _
  $region97: #{act_inference.1} parent=0 // pred_fallthru
    _
  %v77 = vld [vmem:[%s0] sm:$0xff]
  %v78 = vld [vmem:[%s2] sm:$0xff]
  %v79 = vld [vmem:[%s2 + $0x8] sm:$0xff]
  %v80 = vld [vmem:[%s2 + $0x10] sm:$0xff]
  %v81 = vld [vmem:[%s2 + $0x18] sm:$0xf]
  %v82 = vld [vmem:[%s3] sm:$0x1]
  %v84 = vlaneseq
  %v85 = vshrl.u32 %v84, 7
  %v86 = vsub.s32 0, %v85
  %v87 = vrot.slane %v82, %v86
  %vm89 = vcmask 228352
  %v91 = vsel %vm89, %v77, 0
  %vm93 = vcmask 1043456
  %v95 = vsel %vm93, %v81, 0
  %97 = vmatprep.subr.mxu0 0.0
  %98 = vmatpush1.msra.mxu0 %v78
  %99 = vmatprep.subr.mxu0 0.0
  %100 = vmatpush1.msra.mxu0 %v79
  %101 = vmatprep.subr.mxu0 0.0
  %102 = vmatpush1.msra.mxu0 %v80
  %103 = vmatprep.subr.mxu0 0.0
  %104 = vmatpush1.msra.mxu0 %v95
  %105 = vmatprep.subr.mxu0 0.0
  %106 = vmatpush1.msra.mxu0 0.0
  %107 = vmatprep.subr.mxu0 0.0
  %108 = vmatpush1.msra.mxu0 0.0
  %109 = vmatprep.subr.mxu0 0.0
  %110 = vmatpush1.msra.mxu0 0.0
  %111 = vmatprep.subr.mxu0 0.0
  %112 = vmatpush1.msra.mxu0 0.0
  %113 = vmatprep.subr.mxu0 0.0
  %114 = vmatpush1.msra.mxu0 0.0
  %115 = vmatprep.subr.mxu0 0.0
  %116 = vmatpush1.msra.mxu0 0.0
  %117 = vmatprep.subr.mxu0 0.0
  %118 = vmatpush1.msra.mxu0 0.0
  %119 = vmatprep.subr.mxu0 0.0
  %120 = vmatpush1.msra.mxu0 0.0
  %121 = vmatprep.subr.mxu0 0.0
  %122 = vmatpush1.msra.mxu0 0.0
  %123 = vmatprep.subr.mxu0 0.0
  %124 = vmatpush1.msra.mxu0 0.0
  %125 = vmatprep.subr.mxu0 0.0
  %126 = vmatpush1.msra.mxu0 0.0
  %127 = vmatprep.subr.mxu0 0.0
  %128 = vmatpush1.msra.mxu0 0.0
  %129 = vmatprep.subr.mxu0 0.0
  %130 = vmatpush1.msra.mxu0 0.0
  %131 = vmatprep.subr.mxu0 0.0
  %132 = vmatpush1.msra.mxu0 0.0
  %133 = vmatprep.subr.mxu0 0.0
  %134 = vmatpush1.msra.mxu0 0.0
  %135 = vmatprep.subr.mxu0 0.0
  %136 = vmatpush1.msra.mxu0 0.0
  %137 = vmatprep.subr.mxu0 0.0
  %138 = vmatpush1.msra.mxu0 0.0
  %139 = vmatprep.subr.mxu0 0.0
  %140 = vmatpush1.msra.mxu0 0.0
  %141 = vmatprep.subr.mxu0 0.0
  %142 = vmatpush1.msra.mxu0 0.0
  %143 = vmatprep.subr.mxu0 0.0
  %144 = vmatpush1.msra.mxu0 0.0
  %145 = vmatprep.subr.mxu0 0.0
  %146 = vmatpush1.msra.mxu0 0.0
  %147 = vmatprep.subr.mxu0 0.0
  %148 = vmatpush1.msra.mxu0 0.0
  %149 = vmatprep.subr.mxu0 0.0
  %150 = vmatpush1.msra.mxu0 0.0
  %151 = vmatprep.subr.mxu0 0.0
  %152 = vmatpush1.msra.mxu0 0.0
  %153 = vmatprep.subr.mxu0 0.0
  %154 = vmatpush1.msra.mxu0 0.0
  %155 = vmatprep.subr.mxu0 0.0
  %156 = vmatpush1.msra.mxu0 0.0
  %157 = vmatprep.subr.mxu0 0.0
  %158 = vmatpush1.msra.mxu0 0.0
  %159 = vmatprep.subr.mxu0 0.0
  %160 = vmatpush1.msra.mxu0 0.0
  %161 = vmatprep.mubr.f32.mxu0 0.0
  %162 = vmatmul.mubr.f32.gmra.mrb[0].mxu0 %v91
  %v163 = vpop.f32.mrb[0].mxu0
  %v164 = vadd.f32 %v87, %v163
  %v165 = vpop.f32.mrb[0].mxu0
  %166 = vdwg.mxu0
  %vm167 = vcmp.gt.f32.partialorder %v164, 0.0
  %v168 = vmin.f32 %v164, 0.0
  %v169 = vmul.f32 %v168, 1.442695
  %v170 = vpow.pop %v169
  %v171 = vsub.f32 %v170, 1.0
  %v172 = vsel %vm167, %v164, %v171
  %v173 = vld [vmem:[%s4] sm:$0xff]
  %v174 = vld [vmem:[%s4 + $0x8] sm:$0xff]
  %v175 = vld [vmem:[%s4 + $0x10] sm:$0xff]
  %v176 = vld [vmem:[%s4 + $0x18] sm:$0xff]
  %v177 = vld [vmem:[%s5] sm:$0x1]
  %v179 = vlaneseq
  %v180 = vshrl.u32 %v179, 7
  %v181 = vsub.s32 0, %v180
  %v182 = vrot.slane %v177, %v181
  %vm184 = vcmask 261120
  %v186 = vsel %vm184, %v172, 0
  %188 = vmatprep.subr.mxu0 0.0
  %189 = vmatpush1.msra.mxu0 %v173
  %190 = vmatprep.subr.mxu0 0.0
  %191 = vmatpush1.msra.mxu0 %v174
  %192 = vmatprep.subr.mxu0 0.0
  %193 = vmatpush1.msra.mxu0 %v175
  %194 = vmatprep.subr.mxu0 0.0
  %195 = vmatpush1.msra.mxu0 %v176
  %196 = vmatprep.subr.mxu0 0.0
  %197 = vmatpush1.msra.mxu0 0.0
  %198 = vmatprep.subr.mxu0 0.0
  %199 = vmatpush1.msra.mxu0 0.0
  %200 = vmatprep.subr.mxu0 0.0
  %201 = vmatpush1.msra.mxu0 0.0
  %202 = vmatprep.subr.mxu0 0.0
  %203 = vmatpush1.msra.mxu0 0.0
  %204 = vmatprep.subr.mxu0 0.0
  %205 = vmatpush1.msra.mxu0 0.0
  %206 = vmatprep.subr.mxu0 0.0
  %207 = vmatpush1.msra.mxu0 0.0
  %208 = vmatprep.subr.mxu0 0.0
  %209 = vmatpush1.msra.mxu0 0.0
  %210 = vmatprep.subr.mxu0 0.0
  %211 = vmatpush1.msra.mxu0 0.0
  %212 = vmatprep.subr.mxu0 0.0
  %213 = vmatpush1.msra.mxu0 0.0
  %214 = vmatprep.subr.mxu0 0.0
  %215 = vmatpush1.msra.mxu0 0.0
  %216 = vmatprep.subr.mxu0 0.0
  %217 = vmatpush1.msra.mxu0 0.0
  %218 = vmatprep.subr.mxu0 0.0
  %219 = vmatpush1.msra.mxu0 0.0
  %220 = vmatprep.subr.mxu0 0.0
  %221 = vmatpush1.msra.mxu0 0.0
  %222 = vmatprep.subr.mxu0 0.0
  %223 = vmatpush1.msra.mxu0 0.0
  %224 = vmatprep.subr.mxu0 0.0
  %225 = vmatpush1.msra.mxu0 0.0
  %226 = vmatprep.subr.mxu0 0.0
  %227 = vmatpush1.msra.mxu0 0.0
  %228 = vmatprep.subr.mxu0 0.0
  %229 = vmatpush1.msra.mxu0 0.0
  %230 = vmatprep.subr.mxu0 0.0
  %231 = vmatpush1.msra.mxu0 0.0
  %232 = vmatprep.subr.mxu0 0.0
  %233 = vmatpush1.msra.mxu0 0.0
  %234 = vmatprep.subr.mxu0 0.0
  %235 = vmatpush1.msra.mxu0 0.0
  %236 = vmatprep.subr.mxu0 0.0
  %237 = vmatpush1.msra.mxu0 0.0
  %238 = vmatprep.subr.mxu0 0.0
  %239 = vmatpush1.msra.mxu0 0.0
  %240 = vmatprep.subr.mxu0 0.0
  %241 = vmatpush1.msra.mxu0 0.0
  %242 = vmatprep.subr.mxu0 0.0
  %243 = vmatpush1.msra.mxu0 0.0
  %244 = vmatprep.subr.mxu0 0.0
  %245 = vmatpush1.msra.mxu0 0.0
  %246 = vmatprep.subr.mxu0 0.0
  %247 = vmatpush1.msra.mxu0 0.0
  %248 = vmatprep.subr.mxu0 0.0
  %249 = vmatpush1.msra.mxu0 0.0
  %250 = vmatprep.subr.mxu0 0.0
  %251 = vmatpush1.msra.mxu0 0.0
  %252 = vmatprep.mubr.f32.mxu0 0.0
  %253 = vmatmul.mubr.f32.gmra.mrb[0].mxu0 %v186
  %v254 = vpop.f32.mrb[0].mxu0
  %v255 = vadd.f32 %v182, %v254
  %v256 = vpop.f32.mrb[0].mxu0
  %257 = vdwg.mxu0
  %vm258 = vcmp.gt.f32.partialorder %v255, 0.0
  %v259 = vmin.f32 %v255, 0.0
  %v260 = vmul.f32 %v259, 1.442695
  %v261 = vpow.pop %v260
  %v262 = vsub.f32 %v261, 1.0
  %v263 = vsel %vm258, %v255, %v262
  %v264 = vld [vmem:[%s6] sm:$0xff]
  %v265 = vld [vmem:[%s6 + $0x8] sm:$0xff]
  %v266 = vld [vmem:[%s6 + $0x10] sm:$0xff]
  %v267 = vld [vmem:[%s6 + $0x18] sm:$0xff]
  %v268 = vld [vmem:[%s7] sm:$0x1]
  %v270 = vlaneseq
  %v271 = vshrl.u32 %v270, 7
  %v272 = vsub.s32 0, %v271
  %v273 = vrot.slane %v268, %v272
  %v276 = vsel %vm184, %v263, 0
  %278 = vmatprep.subr.mxu0 0.0
  %279 = vmatpush1.msra.mxu0 %v264
  %280 = vmatprep.subr.mxu0 0.0
  %281 = vmatpush1.msra.mxu0 %v265
  %282 = vmatprep.subr.mxu0 0.0
  %283 = vmatpush1.msra.mxu0 %v266
  %284 = vmatprep.subr.mxu0 0.0
  %285 = vmatpush1.msra.mxu0 %v267
  %286 = vmatprep.subr.mxu0 0.0
  %287 = vmatpush1.msra.mxu0 0.0
  %288 = vmatprep.subr.mxu0 0.0
  %289 = vmatpush1.msra.mxu0 0.0
  %290 = vmatprep.subr.mxu0 0.0
  %291 = vmatpush1.msra.mxu0 0.0
  %292 = vmatprep.subr.mxu0 0.0
  %293 = vmatpush1.msra.mxu0 0.0
  %294 = vmatprep.subr.mxu0 0.0
  %295 = vmatpush1.msra.mxu0 0.0
  %296 = vmatprep.subr.mxu0 0.0
  %297 = vmatpush1.msra.mxu0 0.0
  %298 = vmatprep.subr.mxu0 0.0
  %299 = vmatpush1.msra.mxu0 0.0
  %300 = vmatprep.subr.mxu0 0.0
  %301 = vmatpush1.msra.mxu0 0.0
  %302 = vmatprep.subr.mxu0 0.0
  %303 = vmatpush1.msra.mxu0 0.0
  %304 = vmatprep.subr.mxu0 0.0
  %305 = vmatpush1.msra.mxu0 0.0
  %306 = vmatprep.subr.mxu0 0.0
  %307 = vmatpush1.msra.mxu0 0.0
  %308 = vmatprep.subr.mxu0 0.0
  %309 = vmatpush1.msra.mxu0 0.0
  %310 = vmatprep.subr.mxu0 0.0
  %311 = vmatpush1.msra.mxu0 0.0
  %312 = vmatprep.subr.mxu0 0.0
  %313 = vmatpush1.msra.mxu0 0.0
  %314 = vmatprep.subr.mxu0 0.0
  %315 = vmatpush1.msra.mxu0 0.0
  %316 = vmatprep.subr.mxu0 0.0
  %317 = vmatpush1.msra.mxu0 0.0
  %318 = vmatprep.subr.mxu0 0.0
  %319 = vmatpush1.msra.mxu0 0.0
  %320 = vmatprep.subr.mxu0 0.0
  %321 = vmatpush1.msra.mxu0 0.0
  %322 = vmatprep.subr.mxu0 0.0
  %323 = vmatpush1.msra.mxu0 0.0
  %324 = vmatprep.subr.mxu0 0.0
  %325 = vmatpush1.msra.mxu0 0.0
  %326 = vmatprep.subr.mxu0 0.0
  %327 = vmatpush1.msra.mxu0 0.0
  %328 = vmatprep.subr.mxu0 0.0
  %329 = vmatpush1.msra.mxu0 0.0
  %330 = vmatprep.subr.mxu0 0.0
  %331 = vmatpush1.msra.mxu0 0.0
  %332 = vmatprep.subr.mxu0 0.0
  %333 = vmatpush1.msra.mxu0 0.0
  %334 = vmatprep.subr.mxu0 0.0
  %335 = vmatpush1.msra.mxu0 0.0
  %336 = vmatprep.subr.mxu0 0.0
  %337 = vmatpush1.msra.mxu0 0.0
  %338 = vmatprep.subr.mxu0 0.0
  %339 = vmatpush1.msra.mxu0 0.0
  %340 = vmatprep.subr.mxu0 0.0
  %341 = vmatpush1.msra.mxu0 0.0
  %342 = vmatprep.mubr.f32.mxu0 0.0
  %343 = vmatmul.mubr.f32.gmra.mrb[0].mxu0 %v276
  %v344 = vpop.f32.mrb[0].mxu0
  %v345 = vadd.f32 %v273, %v344
  %v346 = vpop.f32.mrb[0].mxu0
  %347 = vdwg.mxu0
  %vm348 = vcmask 15360
  %v349 = vsel %vm348, %v345, -inf
  %350 = vmax.xlane.f32.xlu0 %v349
  %v351 = vpop.xlane.xlu0 %350
  %v352 = vsub.f32 %v345, %v351
  %v353 = vmul.f32 %v352, 1.442695
  %v354 = vpow.pop %v353
  %v355 = vsel %vm348, %v354, 0.0
  %356 = vadd.xlane.f32.xlu0 %v355
  %v357 = vpop.xlane.xlu0 %356
  %v358 = vrcp.pop %v357
  %v359 = vmul.f32 %v354, %v358
  %v360 = vld [vmem:[%s8] sm:$0x3]
  %v361 = vld [vmem:[%s9] sm:$0x1]
  %v363 = vlaneseq
  %v364 = vshrl.u32 %v363, 7
  %v365 = vsub.s32 0, %v364
  %v366 = vrot.slane %v361, %v365
  %368 = vrot.lane.b32.xlu0 %v77, 102
  %v369 = vpop.permute.xlu0 %368
  %v370 = vsel %vm348, %v369, 0
  %vm372 = vcmask 1041408
  %v374 = vsel %vm372, %v360, 0
  %376 = vmatprep.subr.mxu0 0.0
  %377 = vmatpush1.msra.mxu0 %v374
  %378 = vmatprep.subr.mxu0 0.0
  %379 = vmatpush1.msra.mxu0 0.0
  %380 = vmatprep.subr.mxu0 0.0
  %381 = vmatpush1.msra.mxu0 0.0
  %382 = vmatprep.subr.mxu0 0.0
  %383 = vmatpush1.msra.mxu0 0.0
  %384 = vmatprep.subr.mxu0 0.0
  %385 = vmatpush1.msra.mxu0 0.0
  %386 = vmatprep.subr.mxu0 0.0
  %387 = vmatpush1.msra.mxu0 0.0
  %388 = vmatprep.subr.mxu0 0.0
  %389 = vmatpush1.msra.mxu0 0.0
  %390 = vmatprep.subr.mxu0 0.0
  %391 = vmatpush1.msra.mxu0 0.0
  %392 = vmatprep.subr.mxu0 0.0
  %393 = vmatpush1.msra.mxu0 0.0
  %394 = vmatprep.subr.mxu0 0.0
  %395 = vmatpush1.msra.mxu0 0.0
  %396 = vmatprep.subr.mxu0 0.0
  %397 = vmatpush1.msra.mxu0 0.0
  %398 = vmatprep.subr.mxu0 0.0
  %399 = vmatpush1.msra.mxu0 0.0
  %400 = vmatprep.subr.mxu0 0.0
  %401 = vmatpush1.msra.mxu0 0.0
  %402 = vmatprep.subr.mxu0 0.0
  %403 = vmatpush1.msra.mxu0 0.0
  %404 = vmatprep.subr.mxu0 0.0
  %405 = vmatpush1.msra.mxu0 0.0
  %406 = vmatprep.subr.mxu0 0.0
  %407 = vmatpush1.msra.mxu0 0.0
  %408 = vmatprep.subr.mxu0 0.0
  %409 = vmatpush1.msra.mxu0 0.0
  %410 = vmatprep.subr.mxu0 0.0
  %411 = vmatpush1.msra.mxu0 0.0
  %412 = vmatprep.subr.mxu0 0.0
  %413 = vmatpush1.msra.mxu0 0.0
  %414 = vmatprep.subr.mxu0 0.0
  %415 = vmatpush1.msra.mxu0 0.0
  %416 = vmatprep.subr.mxu0 0.0
  %417 = vmatpush1.msra.mxu0 0.0
  %418 = vmatprep.subr.mxu0 0.0
  %419 = vmatpush1.msra.mxu0 0.0
  %420 = vmatprep.subr.mxu0 0.0
  %421 = vmatpush1.msra.mxu0 0.0
  %422 = vmatprep.subr.mxu0 0.0
  %423 = vmatpush1.msra.mxu0 0.0
  %424 = vmatprep.subr.mxu0 0.0
  %425 = vmatpush1.msra.mxu0 0.0
  %426 = vmatprep.subr.mxu0 0.0
  %427 = vmatpush1.msra.mxu0 0.0
  %428 = vmatprep.subr.mxu0 0.0
  %429 = vmatpush1.msra.mxu0 0.0
  %430 = vmatprep.subr.mxu0 0.0
  %431 = vmatpush1.msra.mxu0 0.0
  %432 = vmatprep.subr.mxu0 0.0
  %433 = vmatpush1.msra.mxu0 0.0
  %434 = vmatprep.subr.mxu0 0.0
  %435 = vmatpush1.msra.mxu0 0.0
  %436 = vmatprep.subr.mxu0 0.0
  %437 = vmatpush1.msra.mxu0 0.0
  %438 = vmatprep.subr.mxu0 0.0
  %439 = vmatpush1.msra.mxu0 0.0
  %440 = vmatprep.mubr.f32.mxu0 0.0
  %441 = vmatmul.mubr.f32.gmra.mrb[0].mxu0 %v370
  %v442 = vpop.f32.mrb[0].mxu0
  %v443 = vadd.f32 %v366, %v442
  %v444 = vpop.f32.mrb[0].mxu0
  %445 = vdwg.mxu0
  %v446 = vld [vmem:[%s1] sm:$0xff]
  %v447 = vld [vmem:[%s10] sm:$0x7f]
  %v448 = vld [vmem:[%s11] sm:$0x3]
  %v449 = vld [vmem:[%s12] sm:$0x1]
  %v450 = vld [vmem:[%s13] sm:$0x7f]
  %v451 = vld [vmem:[%s14] sm:$0x3]
  %v452 = vld [vmem:[%s15] sm:$0x1]
  %v453 = vadd.f32 %v447, %v449
  %455 = vset.pattern.permute.xlu0 0
  %456 = vperm.xlu0 %455, %v446
  %v457 = vpop.permute.xlu0 %456
  %v459 = vlaneseq
  %v460 = vshrl.u32 %v459, 7
  %v461 = vsub.s32 0, %v460
  %v462 = vrot.slane %v448, %v461
  %v463 = vmul.f32 %v457, %v462
  %v464 = vlaneseq
  %v465 = vshrl.u32 %v464, 7
  %v466 = vsub.s32 0, %v465
  %v467 = vrot.slane %v453, %v466
  %v468 = vadd.f32 %v467, %v463
  %469 = vset.pattern.permute.xlu0 1
  %470 = vperm.xlu0 %469, %v446
  %v471 = vpop.permute.xlu0 %470
  %v473 = vlaneseq
  %v474 = vshrl.u32 %v473, 7
  %v475 = vsub.s32 1, %v474
  %v476 = vrot.slane %v448, %v475
  %v477 = vmul.f32 %v471, %v476
  %v478 = vadd.f32 %v468, %v477
  %v479 = vadd.f32 %v450, %v452
  %v480 = vlaneseq
  %v481 = vshrl.u32 %v480, 7
  %v482 = vsub.s32 0, %v481
  %v483 = vrot.slane %v451, %v482
  %v484 = vmul.f32 %v457, %v483
  %v485 = vlaneseq
  %v486 = vshrl.u32 %v485, 7
  %v487 = vsub.s32 0, %v486
  %v488 = vrot.slane %v479, %v487
  %v489 = vadd.f32 %v488, %v484
  %v490 = vlaneseq
  %v491 = vshrl.u32 %v490, 7
  %v492 = vsub.s32 1, %v491
  %v493 = vrot.slane %v451, %v492
  %v494 = vmul.f32 %v471, %v493
  %v495 = vadd.f32 %v489, %v494
  %v496 = vmul.f32 %v443, %v478
  %vm497 = vcmask 72704
  %v498 = vsel %vm497, %v496, 0.0
  %499 = vadd.xlane.f32.xlu0 %v498
  %v500 = vpop.xlane.xlu0 %499
  %v501 = vmul.f32 %v500, 0.33333334
  %v503 = vlaneseq
  %v504 = vshrl.u32 %v503, 7
  %v505 = vsub.s32 0, %v504
  %v506 = vrot.slane %v449, %v505
  %v508 = vadd.f32 %v447, %v506
  %509 = vset.pattern.permute.xlu0 2
  %510 = vperm.xlu0 %509, %v446
  %v511 = vpop.permute.xlu0 %510
  %v513 = vmul.f32 %v511, %v462
  %v514 = vlaneseq
  %v515 = vshrl.u32 %v514, 7
  %v516 = vsub.s32 1, %v515
  %v517 = vrot.slane %v508, %v516
  %v518 = vadd.f32 %v517, %v513
  %519 = vset.pattern.permute.xlu0 3
  %520 = vperm.xlu0 %519, %v446
  %v521 = vpop.permute.xlu0 %520
  %v523 = vmul.f32 %v521, %v476
  %v524 = vadd.f32 %v518, %v523
  %v526 = vlaneseq
  %v527 = vshrl.u32 %v526, 7
  %v528 = vsub.s32 0, %v527
  %v529 = vrot.slane %v452, %v528
  %v531 = vadd.f32 %v450, %v529
  %v532 = vmul.f32 %v511, %v483
  %v533 = vlaneseq
  %v534 = vshrl.u32 %v533, 7
  %v535 = vsub.s32 1, %v534
  %v536 = vrot.slane %v531, %v535
  %v537 = vadd.f32 %v536, %v532
  %v538 = vmul.f32 %v521, %v493
  %v539 = vadd.f32 %v537, %v538
  %v540 = vmul.f32 %v443, %v524
  %v541 = vsel %vm497, %v540, 0.0
  %542 = vadd.xlane.f32.xlu0 %v541
  %v543 = vpop.xlane.xlu0 %542
  %v544 = vmul.f32 %v543, 0.33333334
  %545 = vset.pattern.permute.xlu0 4
  %546 = vperm.xlu0 %545, %v446
  %v547 = vpop.permute.xlu0 %546
  %v549 = vmul.f32 %v547, %v462
  %v550 = vlaneseq
  %v551 = vshrl.u32 %v550, 7
  %v552 = vsub.s32 2, %v551
  %v553 = vrot.slane %v508, %v552
  %v554 = vadd.f32 %v553, %v549
  %555 = vset.pattern.permute.xlu0 5
  %556 = vperm.xlu0 %555, %v446
  %v557 = vpop.permute.xlu0 %556
  %v559 = vmul.f32 %v557, %v476
  %v560 = vadd.f32 %v554, %v559
  %v561 = vmul.f32 %v547, %v483
  %v562 = vlaneseq
  %v563 = vshrl.u32 %v562, 7
  %v564 = vsub.s32 2, %v563
  %v565 = vrot.slane %v531, %v564
  %v566 = vadd.f32 %v565, %v561
  %v567 = vmul.f32 %v557, %v493
  %v568 = vadd.f32 %v566, %v567
  %v569 = vmul.f32 %v443, %v560
  %v570 = vsel %vm497, %v569, 0.0
  %571 = vadd.xlane.f32.xlu0 %v570
  %v572 = vpop.xlane.xlu0 %571
  %v573 = vmul.f32 %v572, 0.33333334
  %574 = vset.pattern.permute.xlu0 6
  %575 = vperm.xlu0 %574, %v446
  %v576 = vpop.permute.xlu0 %575
  %v578 = vmul.f32 %v576, %v462
  %v579 = vlaneseq
  %v580 = vshrl.u32 %v579, 7
  %v581 = vsub.s32 3, %v580
  %v582 = vrot.slane %v508, %v581
  %v583 = vadd.f32 %v582, %v578
  %584 = vset.pattern.permute.xlu0 7
  %585 = vperm.xlu0 %584, %v446
  %v586 = vpop.permute.xlu0 %585
  %v588 = vmul.f32 %v586, %v476
  %v589 = vadd.f32 %v583, %v588
  %v590 = vmul.f32 %v576, %v483
  %v591 = vlaneseq
  %v592 = vshrl.u32 %v591, 7
  %v593 = vsub.s32 3, %v592
  %v594 = vrot.slane %v531, %v593
  %v595 = vadd.f32 %v594, %v590
  %v596 = vmul.f32 %v586, %v493
  %v597 = vadd.f32 %v595, %v596
  %v598 = vmul.f32 %v443, %v589
  %v599 = vsel %vm497, %v598, 0.0
  %600 = vadd.xlane.f32.xlu0 %v599
  %v601 = vpop.xlane.xlu0 %600
  %v602 = vmul.f32 %v601, 0.33333334
  %603 = vset.pattern.permute.xlu0 8
  %604 = vperm.xlu0 %603, %v446
  %v605 = vpop.permute.xlu0 %604
  %v607 = vmul.f32 %v605, %v462
  %v608 = vlaneseq
  %v609 = vshrl.u32 %v608, 7
  %v610 = vsub.s32 4, %v609
  %v611 = vrot.slane %v508, %v610
  %v612 = vadd.f32 %v611, %v607
  %613 = vset.pattern.permute.xlu0 9
  %614 = vperm.xlu0 %613, %v446
  %v615 = vpop.permute.xlu0 %614
  %v617 = vmul.f32 %v615, %v476
  %v618 = vadd.f32 %v612, %v617
  %v619 = vmul.f32 %v605, %v483
  %v620 = vlaneseq
  %v621 = vshrl.u32 %v620, 7
  %v622 = vsub.s32 4, %v621
  %v623 = vrot.slane %v531, %v622
  %v624 = vadd.f32 %v623, %v619
  %v625 = vmul.f32 %v615, %v493
  %v626 = vadd.f32 %v624, %v625
  %v627 = vmul.f32 %v443, %v618
  %v628 = vsel %vm497, %v627, 0.0
  %629 = vadd.xlane.f32.xlu0 %v628
  %v630 = vpop.xlane.xlu0 %629
  %v631 = vmul.f32 %v630, 0.33333334
  %632 = vset.pattern.permute.xlu0 10
  %633 = vperm.xlu0 %632, %v446
  %v634 = vpop.permute.xlu0 %633
  %v636 = vmul.f32 %v634, %v462
  %v637 = vlaneseq
  %v638 = vshrl.u32 %v637, 7
  %v639 = vsub.s32 5, %v638
  %v640 = vrot.slane %v508, %v639
  %v641 = vadd.f32 %v640, %v636
  %642 = vset.pattern.permute.xlu0 11
  %643 = vperm.xlu0 %642, %v446
  %v644 = vpop.permute.xlu0 %643
  %v646 = vmul.f32 %v644, %v476
  %v647 = vadd.f32 %v641, %v646
  %v648 = vmul.f32 %v634, %v483
  %v649 = vlaneseq
  %v650 = vshrl.u32 %v649, 7
  %v651 = vsub.s32 5, %v650
  %v652 = vrot.slane %v531, %v651
  %v653 = vadd.f32 %v652, %v648
  %v654 = vmul.f32 %v644, %v493
  %v655 = vadd.f32 %v653, %v654
  %v656 = vmul.f32 %v443, %v647
  %v657 = vsel %vm497, %v656, 0.0
  %658 = vadd.xlane.f32.xlu0 %v657
  %v659 = vpop.xlane.xlu0 %658
  %v660 = vmul.f32 %v659, 0.33333334
  %661 = vset.pattern.permute.xlu0 12
  %662 = vperm.xlu0 %661, %v446
  %v663 = vpop.permute.xlu0 %662
  %v665 = vmul.f32 %v663, %v462
  %v666 = vlaneseq
  %v667 = vshrl.u32 %v666, 7
  %v668 = vsub.s32 6, %v667
  %v669 = vrot.slane %v508, %v668
  %v670 = vadd.f32 %v669, %v665
  %671 = vset.pattern.permute.xlu0 13
  %672 = vperm.xlu0 %671, %v446
  %v673 = vpop.permute.xlu0 %672
  %v675 = vmul.f32 %v673, %v476
  %v676 = vadd.f32 %v670, %v675
  %v677 = vmul.f32 %v663, %v483
  %v678 = vlaneseq
  %v679 = vshrl.u32 %v678, 7
  %v680 = vsub.s32 6, %v679
  %v681 = vrot.slane %v531, %v680
  %v682 = vadd.f32 %v681, %v677
  %v683 = vmul.f32 %v673, %v493
  %v684 = vadd.f32 %v682, %v683
  %v685 = vmul.f32 %v443, %v676
  %v686 = vsel %vm497, %v685, 0.0
  %687 = vadd.xlane.f32.xlu0 %v686
  %v688 = vpop.xlane.xlu0 %687
  %v689 = vmul.f32 %v688, 0.33333334
  %vm690 = vcmask 7168
  %v691 = vsel %vm690, %v501, %v544
  %v692 = vsel %vm348, %v691, %v573
  %vm693 = vcmask 23552
  %v694 = vsel %vm693, %v692, %v602
  %vm695 = vcmask 31744
  %v696 = vsel %vm695, %v694, %v631
  %vm697 = vcmask 39936
  %v698 = vsel %vm697, %v696, %v660
  %vm699 = vcmask 48128
  %v700 = vsel %vm699, %v698, %v689
  %vm701 = vcmask 56320
  %v702 = vsel %vm701, %v700, -inf
  %703 = vmax.xlane.f32.xlu0 %v702
  %v704 = vpop.xlane.xlu0 %703
  %v705 = vsub.f32 %v700, %v704
  %v706 = vmul.f32 %v705, 1.442695
  %v707 = vpow.pop %v706
  %v708 = vsel %vm701, %v707, 0.0
  %709 = vadd.xlane.f32.xlu0 %v708
  %v710 = vpop.xlane.xlu0 %709
  %v711 = vrcp.pop %v710
  %v712 = vmul.f32 %v707, %v711
  %714 = vset.pattern.permute.xlu0 0
  %715 = vperm.xlu0 %714, %v712
  %v716 = vpop.permute.xlu0 %715
  %v718 = vmul.f32 %v716, %v495
  %719 = vset.pattern.permute.xlu0 1
  %720 = vperm.xlu0 %719, %v712
  %v721 = vpop.permute.xlu0 %720
  %v723 = vmul.f32 %v721, %v539
  %v724 = vadd.f32 %v718, %v723
  %725 = vset.pattern.permute.xlu0 2
  %726 = vperm.xlu0 %725, %v712
  %v727 = vpop.permute.xlu0 %726
  %v729 = vmul.f32 %v727, %v568
  %v730 = vadd.f32 %v724, %v729
  %731 = vset.pattern.permute.xlu0 3
  %732 = vperm.xlu0 %731, %v712
  %v733 = vpop.permute.xlu0 %732
  %v735 = vmul.f32 %v733, %v597
  %v736 = vadd.f32 %v730, %v735
  %737 = vset.pattern.permute.xlu0 4
  %738 = vperm.xlu0 %737, %v712
  %v739 = vpop.permute.xlu0 %738
  %v741 = vmul.f32 %v739, %v626
  %v742 = vadd.f32 %v736, %v741
  %743 = vset.pattern.permute.xlu0 5
  %744 = vperm.xlu0 %743, %v712
  %v745 = vpop.permute.xlu0 %744
  %v747 = vmul.f32 %v745, %v655
  %v748 = vadd.f32 %v742, %v747
  %749 = vset.pattern.permute.xlu0 6
  %750 = vperm.xlu0 %749, %v712
  %v751 = vpop.permute.xlu0 %750
  %v753 = vmul.f32 %v751, %v684
  %v754 = vadd.f32 %v748, %v753
  %v755 = vld [vmem:[%s16] sm:$0xff]
  %v756 = vld [vmem:[%s16 + $0x8] sm:$0x1]
  %v757 = vld [vmem:[%s17] sm:$0x1]
  %v759 = vlaneseq
  %v760 = vshrl.u32 %v759, 7
  %v761 = vsub.s32 0, %v760
  %v762 = vrot.slane %v757, %v761
  %v765 = vsel %vm497, %v754, 0
  %vm767 = vcmask 1040384
  %v769 = vsel %vm767, %v756, 0
  %771 = vmatprep.subr.mxu0 0.0
  %772 = vmatpush1.msra.mxu0 %v755
  %773 = vmatprep.subr.mxu0 0.0
  %774 = vmatpush1.msra.mxu0 %v769
  %775 = vmatprep.subr.mxu0 0.0
  %776 = vmatpush1.msra.mxu0 0.0
  %777 = vmatprep.subr.mxu0 0.0
  %778 = vmatpush1.msra.mxu0 0.0
  %779 = vmatprep.subr.mxu0 0.0
  %780 = vmatpush1.msra.mxu0 0.0
  %781 = vmatprep.subr.mxu0 0.0
  %782 = vmatpush1.msra.mxu0 0.0
  %783 = vmatprep.subr.mxu0 0.0
  %784 = vmatpush1.msra.mxu0 0.0
  %785 = vmatprep.subr.mxu0 0.0
  %786 = vmatpush1.msra.mxu0 0.0
  %787 = vmatprep.subr.mxu0 0.0
  %788 = vmatpush1.msra.mxu0 0.0
  %789 = vmatprep.subr.mxu0 0.0
  %790 = vmatpush1.msra.mxu0 0.0
  %791 = vmatprep.subr.mxu0 0.0
  %792 = vmatpush1.msra.mxu0 0.0
  %793 = vmatprep.subr.mxu0 0.0
  %794 = vmatpush1.msra.mxu0 0.0
  %795 = vmatprep.subr.mxu0 0.0
  %796 = vmatpush1.msra.mxu0 0.0
  %797 = vmatprep.subr.mxu0 0.0
  %798 = vmatpush1.msra.mxu0 0.0
  %799 = vmatprep.subr.mxu0 0.0
  %800 = vmatpush1.msra.mxu0 0.0
  %801 = vmatprep.subr.mxu0 0.0
  %802 = vmatpush1.msra.mxu0 0.0
  %803 = vmatprep.subr.mxu0 0.0
  %804 = vmatpush1.msra.mxu0 0.0
  %805 = vmatprep.subr.mxu0 0.0
  %806 = vmatpush1.msra.mxu0 0.0
  %807 = vmatprep.subr.mxu0 0.0
  %808 = vmatpush1.msra.mxu0 0.0
  %809 = vmatprep.subr.mxu0 0.0
  %810 = vmatpush1.msra.mxu0 0.0
  %811 = vmatprep.subr.mxu0 0.0
  %812 = vmatpush1.msra.mxu0 0.0
  %813 = vmatprep.subr.mxu0 0.0
  %814 = vmatpush1.msra.mxu0 0.0
  %815 = vmatprep.subr.mxu0 0.0
  %816 = vmatpush1.msra.mxu0 0.0
  %817 = vmatprep.subr.mxu0 0.0
  %818 = vmatpush1.msra.mxu0 0.0
  %819 = vmatprep.subr.mxu0 0.0
  %820 = vmatpush1.msra.mxu0 0.0
  %821 = vmatprep.subr.mxu0 0.0
  %822 = vmatpush1.msra.mxu0 0.0
  %823 = vmatprep.subr.mxu0 0.0
  %824 = vmatpush1.msra.mxu0 0.0
  %825 = vmatprep.subr.mxu0 0.0
  %826 = vmatpush1.msra.mxu0 0.0
  %827 = vmatprep.subr.mxu0 0.0
  %828 = vmatpush1.msra.mxu0 0.0
  %829 = vmatprep.subr.mxu0 0.0
  %830 = vmatpush1.msra.mxu0 0.0
  %831 = vmatprep.subr.mxu0 0.0
  %832 = vmatpush1.msra.mxu0 0.0
  %833 = vmatprep.subr.mxu0 0.0
  %834 = vmatpush1.msra.mxu0 0.0
  %835 = vmatprep.mubr.f32.mxu0 0.0
  %836 = vmatmul.mubr.f32.gmra.mrb[0].mxu0 %v765
  %v837 = vpop.f32.mrb[0].mxu0
  %v838 = vadd.f32 %v762, %v837
  %v839 = vpop.f32.mrb[0].mxu0
  %840 = vdwg.mxu0
  %v841 = vmul.f32 %v838, %v838
  %v842 = vsel %vm348, %v841, 0.0
  %843 = vadd.xlane.f32.xlu0 %v842
  %v844 = vpop.xlane.xlu0 %843
  %v845 = vrsqrt.pop %v844
  %v846 = vmul.f32 %v844, %v845
  %vm847 = vcmp.eq.f32.partialorder %v844, inf
  %v848 = vsel %vm847, %v844, %v846
  %vm849 = vcmp.eq.f32.partialorder %v844, 0.0
  %v850 = vand.u32 %v844, 2147483648
  %v851 = vsel %vm849, %v850, %v848
  %v852 = vmax.f32 %v851, 1e-12
  %v853 = vrcp.pop %v852
  %v854 = vmul.f32 %v838, %v853
  %v855 = vmul.f32 %v854, 3.0
  %857 = vrot.lane.b32.xlu0 %v855, 12
  %v858 = vpop.permute.xlu0 %857
  %vm860 = vcmask 97280
  %v861 = vsel %vm860, %v77, %v858
  %862 = vrot.lane.b32.xlu0 %v77, 114
  %v863 = vpop.permute.xlu0 %862
  %v865 = vsel %vm860, %v77, %v863
  %866 = vrot.lane.b32.xlu0 %v855, 28
  %v867 = vpop.permute.xlu0 %866
  %v869 = vsel %vm89, %v77, %v867
  %871 = vrot.lane.b32.xlu0 %v865, 14
  %v872 = vpop.permute.xlu0 %871
  %875 = vrot.lane.b32.xlu0 %v869, 28
  %v876 = vpop.permute.xlu0 %875
  %vm878 = vcmask 113664
  %v879 = vsel %vm878, %v861, %v872
  %v880 = vsel %vm89, %v879, %v876
  %v881 = vld [vmem:[%s18] sm:$0xff]
  %v882 = vld [vmem:[%s18 + $0x8] sm:$0xff]
  %v883 = vld [vmem:[%s18 + $0x10] sm:$0xff]
  %v884 = vld [vmem:[%s18 + $0x18] sm:$0xff]
  %v885 = vld [vmem:[%s18 + $0x20] sm:$0xff]
  %v886 = vld [vmem:[%s18 + $0x28] sm:$0xff]
  %v887 = vld [vmem:[%s18 + $0x30] sm:$0xff]
  %v888 = vld [vmem:[%s18 + $0x38] sm:$0x3]
  %v889 = vld [vmem:[%s19] sm:$0x1]
  %v891 = vlaneseq
  %v892 = vshrl.u32 %v891, 7
  %v893 = vsub.s32 0, %v892
  %v894 = vrot.slane %v889, %v893
  %vm896 = vcmask 474112
  %v898 = vsel %vm896, %v880, 0
  %v901 = vsel %vm372, %v888, 0
  %903 = vmatprep.subr.mxu0 0.0
  %904 = vmatpush1.msra.mxu0 %v881
  %905 = vmatprep.subr.mxu0 0.0
  %906 = vmatpush1.msra.mxu0 %v882
  %907 = vmatprep.subr.mxu0 0.0
  %908 = vmatpush1.msra.mxu0 %v883
  %909 = vmatprep.subr.mxu0 0.0
  %910 = vmatpush1.msra.mxu0 %v884
  %911 = vmatprep.subr.mxu0 0.0
  %912 = vmatpush1.msra.mxu0 %v885
  %913 = vmatprep.subr.mxu0 0.0
  %914 = vmatpush1.msra.mxu0 %v886
  %915 = vmatprep.subr.mxu0 0.0
  %916 = vmatpush1.msra.mxu0 %v887
  %917 = vmatprep.subr.mxu0 0.0
  %918 = vmatpush1.msra.mxu0 %v901
  %919 = vmatprep.subr.mxu0 0.0
  %920 = vmatpush1.msra.mxu0 0.0
  %921 = vmatprep.subr.mxu0 0.0
  %922 = vmatpush1.msra.mxu0 0.0
  %923 = vmatprep.subr.mxu0 0.0
  %924 = vmatpush1.msra.mxu0 0.0
  %925 = vmatprep.subr.mxu0 0.0
  %926 = vmatpush1.msra.mxu0 0.0
  %927 = vmatprep.subr.mxu0 0.0
  %928 = vmatpush1.msra.mxu0 0.0
  %929 = vmatprep.subr.mxu0 0.0
  %930 = vmatpush1.msra.mxu0 0.0
  %931 = vmatprep.subr.mxu0 0.0
  %932 = vmatpush1.msra.mxu0 0.0
  %933 = vmatprep.subr.mxu0 0.0
  %934 = vmatpush1.msra.mxu0 0.0
  %935 = vmatprep.subr.mxu0 0.0
  %936 = vmatpush1.msra.mxu0 0.0
  %937 = vmatprep.subr.mxu0 0.0
  %938 = vmatpush1.msra.mxu0 0.0
  %939 = vmatprep.subr.mxu0 0.0
  %940 = vmatpush1.msra.mxu0 0.0
  %941 = vmatprep.subr.mxu0 0.0
  %942 = vmatpush1.msra.mxu0 0.0
  %943 = vmatprep.subr.mxu0 0.0
  %944 = vmatpush1.msra.mxu0 0.0
  %945 = vmatprep.subr.mxu0 0.0
  %946 = vmatpush1.msra.mxu0 0.0
  %947 = vmatprep.subr.mxu0 0.0
  %948 = vmatpush1.msra.mxu0 0.0
  %949 = vmatprep.subr.mxu0 0.0
  %950 = vmatpush1.msra.mxu0 0.0
  %951 = vmatprep.subr.mxu0 0.0
  %952 = vmatpush1.msra.mxu0 0.0
  %953 = vmatprep.subr.mxu0 0.0
  %954 = vmatpush1.msra.mxu0 0.0
  %955 = vmatprep.subr.mxu0 0.0
  %956 = vmatpush1.msra.mxu0 0.0
  %957 = vmatprep.subr.mxu0 0.0
  %958 = vmatpush1.msra.mxu0 0.0
  %959 = vmatprep.subr.mxu0 0.0
  %960 = vmatpush1.msra.mxu0 0.0
  %961 = vmatprep.subr.mxu0 0.0
  %962 = vmatpush1.msra.mxu0 0.0
  %963 = vmatprep.subr.mxu0 0.0
  %964 = vmatpush1.msra.mxu0 0.0
  %965 = vmatprep.subr.mxu0 0.0
  %966 = vmatpush1.msra.mxu0 0.0
  %967 = vmatprep.mubr.f32.mxu0 0.0
  %968 = vmatmul.mubr.f32.gmra.mrb[0].mxu0 %v898
  %v969 = vpop.f32.mrb[0].mxu0
  %v970 = vadd.f32 %v894, %v969
  %v971 = vpop.f32.mrb[0].mxu0
  %972 = vdwg.mxu0
  %vm973 = vcmp.gt.f32.partialorder %v970, 0.0
  %v974 = vmin.f32 %v970, 0.0
  %v975 = vmul.f32 %v974, 1.442695
  %v976 = vpow.pop %v975
  %v977 = vsub.f32 %v976, 1.0
  %v978 = vsel %vm973, %v970, %v977
  %v979 = vld [vmem:[%s20] sm:$0xff]
  %v980 = vld [vmem:[%s20 + $0x8] sm:$0xff]
  %v981 = vld [vmem:[%s20 + $0x10] sm:$0xff]
  %v982 = vld [vmem:[%s20 + $0x18] sm:$0xff]
  %v983 = vld [vmem:[%s20 + $0x20] sm:$0xff]
  %v984 = vld [vmem:[%s20 + $0x28] sm:$0xff]
  %v985 = vld [vmem:[%s20 + $0x30] sm:$0xff]
  %v986 = vld [vmem:[%s20 + $0x38] sm:$0xff]
  %v987 = vld [vmem:[%s20 + $0x40] sm:$0xff]
  %v988 = vld [vmem:[%s20 + $0x48] sm:$0xff]
  %v989 = vld [vmem:[%s20 + $0x50] sm:$0xff]
  %v990 = vld [vmem:[%s20 + $0x58] sm:$0xff]
  %v991 = vld [vmem:[%s20 + $0x60] sm:$0xff]
  %v992 = vld [vmem:[%s20 + $0x68] sm:$0xff]
  %v993 = vld [vmem:[%s20 + $0x70] sm:$0xff]
  %v994 = vld [vmem:[%s20 + $0x78] sm:$0xff]
  %v995 = vld [vmem:[%s21] sm:$0x1]
  %v997 = vlaneseq
  %v998 = vshrl.u32 %v997, 7
  %v999 = vsub.s32 0, %v998
  %v1000 = vrot.slane %v995, %v999
  %1002 = vmatprep.subr.mxu0 0.0
  %1003 = vmatpush1.msra.mxu0 %v979
  %1004 = vmatprep.subr.mxu0 0.0
  %1005 = vmatpush1.msra.mxu0 %v980
  %1006 = vmatprep.subr.mxu0 0.0
  %1007 = vmatpush1.msra.mxu0 %v981
  %1008 = vmatprep.subr.mxu0 0.0
  %1009 = vmatpush1.msra.mxu0 %v982
  %1010 = vmatprep.subr.mxu0 0.0
  %1011 = vmatpush1.msra.mxu0 %v983
  %1012 = vmatprep.subr.mxu0 0.0
  %1013 = vmatpush1.msra.mxu0 %v984
  %1014 = vmatprep.subr.mxu0 0.0
  %1015 = vmatpush1.msra.mxu0 %v985
  %1016 = vmatprep.subr.mxu0 0.0
  %1017 = vmatpush1.msra.mxu0 %v986
  %1018 = vmatprep.subr.mxu0 0.0
  %1019 = vmatpush1.msra.mxu0 %v987
  %1020 = vmatprep.subr.mxu0 0.0
  %1021 = vmatpush1.msra.mxu0 %v988
  %1022 = vmatprep.subr.mxu0 0.0
  %1023 = vmatpush1.msra.mxu0 %v989
  %1024 = vmatprep.subr.mxu0 0.0
  %1025 = vmatpush1.msra.mxu0 %v990
  %1026 = vmatprep.subr.mxu0 0.0
  %1027 = vmatpush1.msra.mxu0 %v991
  %1028 = vmatprep.subr.mxu0 0.0
  %1029 = vmatpush1.msra.mxu0 %v992
  %1030 = vmatprep.subr.mxu0 0.0
  %1031 = vmatpush1.msra.mxu0 %v993
  %1032 = vmatprep.subr.mxu0 0.0
  %1033 = vmatpush1.msra.mxu0 %v994
  %1034 = vmatprep.subr.mxu0 0.0
  %1035 = vmatpush1.msra.mxu0 0.0
  %1036 = vmatprep.subr.mxu0 0.0
  %1037 = vmatpush1.msra.mxu0 0.0
  %1038 = vmatprep.subr.mxu0 0.0
  %1039 = vmatpush1.msra.mxu0 0.0
  %1040 = vmatprep.subr.mxu0 0.0
  %1041 = vmatpush1.msra.mxu0 0.0
  %1042 = vmatprep.subr.mxu0 0.0
  %1043 = vmatpush1.msra.mxu0 0.0
  %1044 = vmatprep.subr.mxu0 0.0
  %1045 = vmatpush1.msra.mxu0 0.0
  %1046 = vmatprep.subr.mxu0 0.0
  %1047 = vmatpush1.msra.mxu0 0.0
  %1048 = vmatprep.subr.mxu0 0.0
  %1049 = vmatpush1.msra.mxu0 0.0
  %1050 = vmatprep.subr.mxu0 0.0
  %1051 = vmatpush1.msra.mxu0 0.0
  %1052 = vmatprep.subr.mxu0 0.0
  %1053 = vmatpush1.msra.mxu0 0.0
  %1054 = vmatprep.subr.mxu0 0.0
  %1055 = vmatpush1.msra.mxu0 0.0
  %1056 = vmatprep.subr.mxu0 0.0
  %1057 = vmatpush1.msra.mxu0 0.0
  %1058 = vmatprep.subr.mxu0 0.0
  %1059 = vmatpush1.msra.mxu0 0.0
  %1060 = vmatprep.subr.mxu0 0.0
  %1061 = vmatpush1.msra.mxu0 0.0
  %1062 = vmatprep.subr.mxu0 0.0
  %1063 = vmatpush1.msra.mxu0 0.0
  %1064 = vmatprep.subr.mxu0 0.0
  %1065 = vmatpush1.msra.mxu0 0.0
  %1066 = vmatprep.mubr.f32.mxu0 0.0
  %1067 = vmatmul.mubr.f32.gmra.mrb[0].mxu0 %v978
  %v1068 = vpop.f32.mrb[0].mxu0
  %v1069 = vadd.f32 %v1000, %v1068
  %v1070 = vpop.f32.mrb[0].mxu0
  %1071 = vdwg.mxu0
  %vm1072 = vcmp.gt.f32.partialorder %v1069, 0.0
  %v1073 = vmin.f32 %v1069, 0.0
  %v1074 = vmul.f32 %v1073, 1.442695
  %v1075 = vpow.pop %v1074
  %v1076 = vsub.f32 %v1075, 1.0
  %v1077 = vsel %vm1072, %v1069, %v1076
  %vm1078 = vcmask 785408
  %v1079 = vsel %vm1078, %v1077, %v978
  %v1080 = vld [vmem:[%s22] sm:$0xff]
  %v1081 = vld [vmem:[%s22 + $0x8] sm:$0xff]
  %v1082 = vld [vmem:[%s22 + $0x10] sm:$0xff]
  %v1083 = vld [vmem:[%s22 + $0x18] sm:$0xff]
  %v1084 = vld [vmem:[%s22 + $0x20] sm:$0xff]
  %v1085 = vld [vmem:[%s22 + $0x28] sm:$0xff]
  %v1086 = vld [vmem:[%s22 + $0x30] sm:$0xff]
  %v1087 = vld [vmem:[%s22 + $0x38] sm:$0xff]
  %v1088 = vld [vmem:[%s22 + $0x40] sm:$0xff]
  %v1089 = vld [vmem:[%s22 + $0x48] sm:$0xff]
  %v1090 = vld [vmem:[%s22 + $0x50] sm:$0xff]
  %v1091 = vld [vmem:[%s22 + $0x58] sm:$0xff]
  %v1092 = vld [vmem:[%s22 + $0x60] sm:$0xff]
  %v1093 = vld [vmem:[%s22 + $0x68] sm:$0xff]
  %v1094 = vld [vmem:[%s22 + $0x70] sm:$0xff]
  %v1095 = vld [vmem:[%s22 + $0x78] sm:$0xff]
  %v1096 = vld [vmem:[%s23] sm:$0x1]
  %v1098 = vlaneseq
  %v1099 = vshrl.u32 %v1098, 7
  %v1100 = vsub.s32 0, %v1099
  %v1101 = vrot.slane %v1096, %v1100
  %1103 = vmatprep.subr.mxu0 0.0
  %1104 = vmatpush1.msra.mxu0 %v1080
  %1105 = vmatprep.subr.mxu0 0.0
  %1106 = vmatpush1.msra.mxu0 %v1081
  %1107 = vmatprep.subr.mxu0 0.0
  %1108 = vmatpush1.msra.mxu0 %v1082
  %1109 = vmatprep.subr.mxu0 0.0
  %1110 = vmatpush1.msra.mxu0 %v1083
  %1111 = vmatprep.subr.mxu0 0.0
  %1112 = vmatpush1.msra.mxu0 %v1084
  %1113 = vmatprep.subr.mxu0 0.0
  %1114 = vmatpush1.msra.mxu0 %v1085
  %1115 = vmatprep.subr.mxu0 0.0
  %1116 = vmatpush1.msra.mxu0 %v1086
  %1117 = vmatprep.subr.mxu0 0.0
  %1118 = vmatpush1.msra.mxu0 %v1087
  %1119 = vmatprep.subr.mxu0 0.0
  %1120 = vmatpush1.msra.mxu0 %v1088
  %1121 = vmatprep.subr.mxu0 0.0
  %1122 = vmatpush1.msra.mxu0 %v1089
  %1123 = vmatprep.subr.mxu0 0.0
  %1124 = vmatpush1.msra.mxu0 %v1090
  %1125 = vmatprep.subr.mxu0 0.0
  %1126 = vmatpush1.msra.mxu0 %v1091
  %1127 = vmatprep.subr.mxu0 0.0
  %1128 = vmatpush1.msra.mxu0 %v1092
  %1129 = vmatprep.subr.mxu0 0.0
  %1130 = vmatpush1.msra.mxu0 %v1093
  %1131 = vmatprep.subr.mxu0 0.0
  %1132 = vmatpush1.msra.mxu0 %v1094
  %1133 = vmatprep.subr.mxu0 0.0
  %1134 = vmatpush1.msra.mxu0 %v1095
  %1135 = vmatprep.subr.mxu0 0.0
  %1136 = vmatpush1.msra.mxu0 0.0
  %1137 = vmatprep.subr.mxu0 0.0
  %1138 = vmatpush1.msra.mxu0 0.0
  %1139 = vmatprep.subr.mxu0 0.0
  %1140 = vmatpush1.msra.mxu0 0.0
  %1141 = vmatprep.subr.mxu0 0.0
  %1142 = vmatpush1.msra.mxu0 0.0
  %1143 = vmatprep.subr.mxu0 0.0
  %1144 = vmatpush1.msra.mxu0 0.0
  %1145 = vmatprep.subr.mxu0 0.0
  %1146 = vmatpush1.msra.mxu0 0.0
  %1147 = vmatprep.subr.mxu0 0.0
  %1148 = vmatpush1.msra.mxu0 0.0
  %1149 = vmatprep.subr.mxu0 0.0
  %1150 = vmatpush1.msra.mxu0 0.0
  %1151 = vmatprep.subr.mxu0 0.0
  %1152 = vmatpush1.msra.mxu0 0.0
  %1153 = vmatprep.subr.mxu0 0.0
  %1154 = vmatpush1.msra.mxu0 0.0
  %1155 = vmatprep.subr.mxu0 0.0
  %1156 = vmatpush1.msra.mxu0 0.0
  %1157 = vmatprep.subr.mxu0 0.0
  %1158 = vmatpush1.msra.mxu0 0.0
  %1159 = vmatprep.subr.mxu0 0.0
  %1160 = vmatpush1.msra.mxu0 0.0
  %1161 = vmatprep.subr.mxu0 0.0
  %1162 = vmatpush1.msra.mxu0 0.0
  %1163 = vmatprep.subr.mxu0 0.0
  %1164 = vmatpush1.msra.mxu0 0.0
  %1165 = vmatprep.subr.mxu0 0.0
  %1166 = vmatpush1.msra.mxu0 0.0
  %1167 = vmatprep.mubr.f32.mxu0 0.0
  %1168 = vmatmul.mubr.f32.gmra.mrb[0].mxu0 %v1079
  %v1169 = vpop.f32.mrb[0].mxu0
  %v1170 = vadd.f32 %v1101, %v1169
  %v1171 = vpop.f32.mrb[0].mxu0
  %1172 = vdwg.mxu0
  %v1173 = vand.u32 2147483647, %v1170
  %vm1174 = vcmask 408960
  %v1175 = vsel %vm1174, %v1170, -inf
  %1176 = vmax.xlane.f32.xlu0 %v1175
  %v1177 = vpop.xlane.xlu0 %1176
  %v1178 = vsub.f32 %v1170, %v1177
  %v1179 = vmul.f32 %v1178, 1.442695
  %v1180 = vpow.pop %v1179
  %1182 = vrot.lane.b32.xlu0 %v1180, 80
  %v1183 = vpop.permute.xlu0 %1182
  %v1185 = vsel %vm348, %v1183, 0.0
  %1186 = vadd.xlane.f32.xlu0 %v1185
  %v1187 = vpop.xlane.xlu0 %1186
  %v1188 = vrcp.pop %v1187
  %v1189 = vmul.f32 %v1180, %v1188
  %v1190 = vadd.f32 %v1173, 0.01
  %1192 = vset.pattern.permute.xlu0 48
  %1193 = vperm.xlu0 %1192, %v1189
  %v1194 = vpop.permute.xlu0 %1193
  %v1196 = vrcp.pop %v1190
  %v1197 = vmul.f32 %v1194, %v1196
  %1198 = vset.pattern.permute.xlu0 49
  %1199 = vperm.xlu0 %1198, %v1189
  %v1200 = vpop.permute.xlu0 %1199
  %v1202 = vmul.f32 %v1200, %v1196
  %1204 = vrot.lane.b32.xlu0 %v1202, 112
  %v1205 = vpop.permute.xlu0 %1204
  %v1207 = vadd.f32 %v1197, %v1205
  %v1208 = vrcp.pop %v1207
  %1210 = vrot.lane.b32.xlu0 %v1197, 120
  %v1211 = vpop.permute.xlu0 %1210
  %v1213 = vmul.f32 %v1170, %v1211
  %1214 = vrot.lane.b32.xlu0 %v1202, 120
  %v1215 = vpop.permute.xlu0 %1214
  %v1217 = vmul.f32 %v1170, %v1215
  %1219 = vrot.lane.b32.xlu0 %v1217, 112
  %v1220 = vpop.permute.xlu0 %1219
  %v1222 = vadd.f32 %v1213, %v1220
  %1224 = vrot.lane.b32.xlu0 %v1222, 8
  %v1225 = vpop.permute.xlu0 %1224
  %v1227 = vmul.f32 %v1208, %v1225
  %v1228 = vadd.f32 %v1208, 0.01
  %1230 = vset.pattern.permute.xlu0 0
  %1231 = vperm.xlu0 %1230, %v359
  %v1232 = vpop.permute.xlu0 %1231
  %v1234 = vrcp.pop %v1228
  %v1235 = vmul.f32 %v1232, %v1234
  %1236 = vset.pattern.permute.xlu0 1
  %1237 = vperm.xlu0 %1236, %v359
  %v1238 = vpop.permute.xlu0 %1237
  %v1240 = vmul.f32 %v1238, %v1196
  %1242 = vrot.lane.b32.xlu0 %v1240, 96
  %v1243 = vpop.permute.xlu0 %1242
  %v1245 = vadd.f32 %v1235, %v1243
  %v1246 = vrcp.pop %v1245
  %v1247 = vmul.f32 %v1227, %v1235
  %1248 = vrot.lane.b32.xlu0 %v1240, 120
  %v1249 = vpop.permute.xlu0 %1248
  %v1251 = vmul.f32 %v1170, %v1249
  %1253 = vrot.lane.b32.xlu0 %v1251, 104
  %v1254 = vpop.permute.xlu0 %1253
  %v1256 = vadd.f32 %v1247, %v1254
  %v1257 = vmul.f32 %v1246, %v1256
  %1259 = vrot.lane.b32.xlu0 %v1257, 120
  %v1260 = vpop.permute.xlu0 %1259
  %vm1262 = vcmask 64512
  %1263 = vst.msk [vmem:[%s24] sm:$0xff] %vm1262, %v1260
  // Predicated region
  $region98: #{act_inference.1} parent=0 // pred_check
    _
  $region99: #{act_inference.1} parent=0 // pred_check_branch
    %1265 = sbr.rel (0) target = $region101
  $region100: #{act_inference.1} parent=0 // pred_region
    _
  $region101: #{act_inference.1} parent=0 // pred_fallthru
    _
  // Predicated region
  $region102: #{act_inference.1} parent=0 // pred_check
    _
  $region103: #{act_inference.1} parent=0 // pred_check_branch
    %1267 = sbr.rel (0) target = $region105
  $region104: #{act_inference.1} parent=0 // pred_region
    _
  $region105: #{act_inference.1} parent=0 // pred_fallthru
    _

</llo_original>
